<compile_context>
chip_gen: v5e
topology: v5e:2x2
jax: 0.10.0
libtpu: 0.0.40
codegen_flags: <defaults>
</compile_context>

<pallas_src>
import functools

import jax
import jax.numpy as jnp
import numpy as np
from jax.experimental import pallas as pl
from jax.experimental.pallas import tpu as pltpu


def _round_up(x, m):
    return (x + m - 1) // m * m


def basic_block_kernel(x_ref, w1_ref, w2_ref, s1_ref, b1_ref, s2_ref, b2_ref,
                       mask_ref, o_ref, o1_ref, *, Wp):
    # x_ref : (1, Cp, XW)   bf16  flattened zero-padded image (lane axis = pixels)
    # w*_ref: (9, Cp, Cp)   bf16  per-tap (out_ch, in_ch) matrices, tap = kh*3+kw
    # s*,b* : (Cp, 1)       f32   folded BatchNorm scale / bias
    # mask  : (1, W1)       f32   1.0 on interior pixels of the padded grid
    # o_ref : (1, Cp, Mout) bf16  output slab
    # o1_ref: (Cp, W1)      bf16  VMEM scratch: conv1 output incl. conv2 halo
    L = Wp + 1                       # max |flat offset| of a 3x3 tap
    Cp = o1_ref.shape[0]
    W1 = o1_ref.shape[1]             # conv1 slab width  (= Mout + 2L, aligned)
    Mout = o_ref.shape[2]            # output slab width (>= Hp*Wp, aligned)
    offs = [(kh - 1) * Wp + (kw - 1) for kh in range(3) for kw in range(3)]

    # ---- conv1 (3x3, pad 1) + bn1 + relu, over the wider (haloed) slab ----
    acc1 = jnp.zeros((Cp, W1), jnp.float32)
    for t, d in enumerate(offs):
        tap = x_ref[0, :, L + d:L + d + W1]          # (Cp, W1) bf16 lane window
        acc1 = acc1 + jnp.dot(w1_ref[t], tap,
                              preferred_element_type=jnp.float32)
    out1 = jnp.maximum(acc1 * s1_ref[...] + b1_ref[...], 0.0) * mask_ref[...]
    o1_ref[...] = out1.astype(o1_ref.dtype)

    # ---- conv2 (3x3, pad 1) + bn2 + residual add + relu (fused epilogue) ----
    acc2 = jnp.zeros((Cp, Mout), jnp.float32)
    for t, d in enumerate(offs):
        tap = o1_ref[:, L + d:L + d + Mout]          # (Cp, Mout) bf16
        acc2 = acc2 + jnp.dot(w2_ref[t], tap,
                              preferred_element_type=jnp.float32)
    out2 = acc2 * s2_ref[...] + b2_ref[...]
    residual = x_ref[0, :, 2 * L:2 * L + Mout].astype(jnp.float32)
    o_ref[0] = jnp.maximum(out2 + residual, 0.0).astype(o_ref.dtype)


def basic_block_pallas(x_nchw, params):
    """x_nchw: (N, C, H, W) f32.  params = (w1, s1, b1, w2, s2, b2), w in HWIO."""
    w1, s1, b1, w2, s2, b2 = params
    N, C, H, W = x_nchw.shape
    P = w1.shape[-1]
    assert P == C, "stride=1 / downsample=None BasicBlock needs planes == inplanes"

    Cp = max(8, _round_up(C, 8))       # pad channels to a sublane multiple only
    Hp, Wp = H + 2, W + 2              # spatial zero-pad ring (pad=1)
    M0 = Hp * Wp                       # flattened padded-grid size
    L = Wp + 1                         # max |flat offset| of a 3x3 tap
    Mout = _round_up(M0, 128)          # lane-aligned output slab
    W1 = _round_up(Mout + 2 * L, 128)  # conv1 slab (carries conv2's halo)
    XW = _round_up(W1 + 2 * L, 128)    # input slab (carries conv1's halo)

    # NCHW -> pad channels to Cp and spatial with a zero ring, flatten pixels,
    # place the padded grid at offset 2L inside the input slab, cast to bf16.
    xpad = jnp.pad(x_nchw.astype(jnp.float32),
                   ((0, 0), (0, Cp - C), (1, 1), (1, 1)))       # (N, Cp, Hp, Wp)
    xflat = xpad.reshape(N, Cp, M0)
    x_ext = jnp.pad(xflat, ((0, 0), (0, 0), (2 * L, XW - 2 * L - M0)))
    x_ext = x_ext.astype(jnp.bfloat16)

    # HWIO conv weights -> per-tap (out_ch, in_ch) matrices, zero-padded, taps flat.
    def pack_w(w):
        wt = jnp.transpose(w.astype(jnp.float32), (0, 1, 3, 2))   # (3,3,out,in)
        wp = jnp.zeros((3, 3, Cp, Cp), jnp.float32).at[:, :, :P, :C].set(wt)
        return wp.reshape(9, Cp, Cp).astype(jnp.bfloat16)

    w1p, w2p = pack_w(w1), pack_w(w2)

    def col(v):  # folded BN scale / bias as (Cp, 1) f32 columns
        return jnp.zeros((Cp, 1), jnp.float32).at[:P, 0].set(v.astype(jnp.float32))

    s1p, b1p, s2p, b2p = col(s1), col(b1), col(s2), col(b2)

    # 0/1 interior mask over the conv1 slab (re-creates conv2's zero padding).
    j = jnp.arange(W1)
    p = j - L
    row, colp = p // Wp, p % Wp
    interior = ((p >= 0) & (p < M0) &
                (row >= 1) & (row <= H) & (colp >= 1) & (colp <= W))
    mask = interior.astype(jnp.float32)[None, :]                  # (1, W1)

    out = pl.pallas_call(
        functools.partial(basic_block_kernel, Wp=Wp),
        out_shape=jax.ShapeDtypeStruct((N, Cp, Mout), jnp.bfloat16),
        grid=(N,),
        in_specs=[
            pl.BlockSpec((1, Cp, XW), lambda n: (n, 0, 0)),
            pl.BlockSpec((9, Cp, Cp), lambda n: (0, 0, 0)),
            pl.BlockSpec((9, Cp, Cp), lambda n: (0, 0, 0)),
            pl.BlockSpec((Cp, 1), lambda n: (0, 0)),
            pl.BlockSpec((Cp, 1), lambda n: (0, 0)),
            pl.BlockSpec((Cp, 1), lambda n: (0, 0)),
            pl.BlockSpec((Cp, 1), lambda n: (0, 0)),
            pl.BlockSpec((1, W1), lambda n: (0, 0)),
        ],
        out_specs=pl.BlockSpec((1, Cp, Mout), lambda n: (n, 0, 0)),
        scratch_shapes=[pltpu.VMEM((Cp, W1), jnp.bfloat16)],
        compiler_params=pltpu.CompilerParams(dimension_semantics=("parallel",)),
    )(x_ext, w1p, w2p, s1p, b1p, s2p, b2p, mask)

    # drop padded channels / padded pixels, back to NCHW f32
    out = out[:, :C, :M0].astype(jnp.float32).reshape(N, C, Hp, Wp)
    return out[:, :, 1:H + 1, 1:W + 1]


def basic_block_ref(x_nchw, params):
    """Pure-JAX reference of BasicBlock.forward (inference-mode BN)."""
    w1, s1, b1, w2, s2, b2 = params
    dn = ('NCHW', 'HWIO', 'NCHW')
    hp = jax.lax.Precision.HIGHEST
    x = x_nchw.astype(jnp.float32)
    out = jax.lax.conv_general_dilated(x, w1, (1, 1), 'SAME',
                                       dimension_numbers=dn, precision=hp)
    out = out * s1[None, :, None, None] + b1[None, :, None, None]
    out = jnp.maximum(out, 0.0)
    out = jax.lax.conv_general_dilated(out, w2, (1, 1), 'SAME',
                                       dimension_numbers=dn, precision=hp)
    out = out * s2[None, :, None, None] + b2[None, :, None, None]
    out = jnp.maximum(out + x, 0.0)
    return out


if __name__ == "__main__":
    N, C, H, W = 2, 4, 16, 16
    P = C  # planes == inplanes (stride=1, downsample=None, use_cbam=False)
    eps = 1e-5

    key = jax.random.PRNGKey(0)
    ks = jax.random.split(key, 12)

    # conv weights (HWIO), deterministic synthetic init
    w1 = 0.1 * jax.random.normal(ks[0], (3, 3, C, P), jnp.float32)
    w2 = 0.1 * jax.random.normal(ks[1], (3, 3, P, P), jnp.float32)

    # BatchNorm params (inference mode) -> folded scale / bias
    gamma1 = 1.0 + 0.1 * jax.random.normal(ks[2], (P,), jnp.float32)
    beta1 = 0.1 * jax.random.normal(ks[3], (P,), jnp.float32)
    mean1 = 0.1 * jax.random.normal(ks[4], (P,), jnp.float32)
    var1 = jax.random.uniform(ks[5], (P,), jnp.float32, 0.5, 1.5)
    gamma2 = 1.0 + 0.1 * jax.random.normal(ks[6], (P,), jnp.float32)
    beta2 = 0.1 * jax.random.normal(ks[7], (P,), jnp.float32)
    mean2 = 0.1 * jax.random.normal(ks[8], (P,), jnp.float32)
    var2 = jax.random.uniform(ks[9], (P,), jnp.float32, 0.5, 1.5)

    s1 = gamma1 / jnp.sqrt(var1 + eps)
    b1 = beta1 - mean1 * s1
    s2 = gamma2 / jnp.sqrt(var2 + eps)
    b2 = beta2 - mean2 * s2

    params = (w1, s1, b1, w2, s2, b2)

    x = jax.random.normal(ks[10], (N, C, H, W), jnp.float32)

    out = basic_block_pallas(x, params)
    out = jax.block_until_ready(out)

    # Reference: f32 math on the same bf16-rounded activations / conv weights
    # the kernel consumes (the kernel itself accumulates in f32).
    xq = x.astype(jnp.bfloat16).astype(jnp.float32)
    w1q = w1.astype(jnp.bfloat16).astype(jnp.float32)
    w2q = w2.astype(jnp.bfloat16).astype(jnp.float32)
    ref = basic_block_ref(xq, (w1q, s1, b1, w2q, s2, b2))

    assert out.shape == ref.shape, (out.shape, ref.shape)
    err = float(np.max(np.abs(np.asarray(out) - np.asarray(ref))))
    assert np.allclose(np.asarray(out), np.asarray(ref), atol=2e-2, rtol=2e-2), err

    print("KERNEL_OK")
</pallas_src>

<mosaic_0001>
module attributes {stable_mosaic.version = 11 : i64} {
  func.func @basic_block_kernel(%arg0: i32, %arg1: memref<1x8x640xbf16, #tpu.memory_space<vmem>>, %arg2: memref<9x8x8xbf16, #tpu.memory_space<vmem>>, %arg3: memref<9x8x8xbf16, #tpu.memory_space<vmem>>, %arg4: memref<8x1xf32, #tpu.memory_space<vmem>>, %arg5: memref<8x1xf32, #tpu.memory_space<vmem>>, %arg6: memref<8x1xf32, #tpu.memory_space<vmem>>, %arg7: memref<8x1xf32, #tpu.memory_space<vmem>>, %arg8: memref<1x512xf32, #tpu.memory_space<vmem>>, %arg9: memref<1x8x384xbf16, #tpu.memory_space<vmem>>, %arg10: memref<8x512xbf16, #tpu.memory_space<vmem>>) attributes {dimension_semantics = [#tpu.dimension_semantics<parallel>], iteration_bounds = array<i64: 2>, scalar_prefetch = 0 : i64, scratch_operands = 1 : i64, tpu.core_type = #tpu.core_type<tc>, window_params = [{transform_indices = @transform_0, window_bounds = array<i64: 1, 8, 640>}, {pipeline_mode = #tpu.pipeline_mode<synchronous>, transform_indices = @transform_1, window_bounds = array<i64: 9, 8, 8>}, {pipeline_mode = #tpu.pipeline_mode<synchronous>, transform_indices = @transform_2, window_bounds = array<i64: 9, 8, 8>}, {pipeline_mode = #tpu.pipeline_mode<synchronous>, transform_indices = @transform_3, window_bounds = array<i64: 8, 1>}, {pipeline_mode = #tpu.pipeline_mode<synchronous>, transform_indices = @transform_4, window_bounds = array<i64: 8, 1>}, {pipeline_mode = #tpu.pipeline_mode<synchronous>, transform_indices = @transform_5, window_bounds = array<i64: 8, 1>}, {pipeline_mode = #tpu.pipeline_mode<synchronous>, transform_indices = @transform_6, window_bounds = array<i64: 8, 1>}, {pipeline_mode = #tpu.pipeline_mode<synchronous>, transform_indices = @transform_7, window_bounds = array<i64: 1, 512>}, {transform_indices = @transform_8, window_bounds = array<i64: 1, 8, 384>}]} {
    %cst = arith.constant 0.000000e+00 : f32
    %0 = vector.broadcast %cst : f32 to vector<8x512xf32>
    %c0 = arith.constant 0 : index
    %c0_0 = arith.constant 0 : index
    %c0_1 = arith.constant 0 : index
    %1 = vector.load %arg1[%c0, %c0_0, %c0_1] : memref<1x8x640xbf16, #tpu.memory_space<vmem>>, vector<1x8x512xbf16>
    %2 = vector.shape_cast %1 : vector<1x8x512xbf16> to vector<8x512xbf16>
    %c0_2 = arith.constant 0 : index
    %c0_3 = arith.constant 0 : index
    %c0_4 = arith.constant 0 : index
    %3 = vector.load %arg2[%c0_2, %c0_3, %c0_4] : memref<9x8x8xbf16, #tpu.memory_space<vmem>>, vector<1x8x8xbf16>
    %4 = vector.shape_cast %3 : vector<1x8x8xbf16> to vector<8x8xbf16>
    %cst_5 = arith.constant dense<0.000000e+00> : vector<8x512xf32>
    %5 = tpu.matmul %4, %2, %cst_5 {dimension_numbers = #tpu.dot_dimension_numbers<[1], [0], [0], [1], [0, 0, 1, 1], [], []>} : vector<8x8xbf16>, vector<8x512xbf16>, vector<8x512xf32> -> vector<8x512xf32>
    %6 = arith.addf %0, %5 : vector<8x512xf32>
    %c0_6 = arith.constant 0 : index
    %c0_7 = arith.constant 0 : index
    %c1 = arith.constant 1 : index
    %7 = vector.load %arg1[%c0_6, %c0_7, %c1] : memref<1x8x640xbf16, #tpu.memory_space<vmem>>, vector<1x8x512xbf16>
    %8 = vector.shape_cast %7 : vector<1x8x512xbf16> to vector<8x512xbf16>
    %c1_8 = arith.constant 1 : index
    %c0_9 = arith.constant 0 : index
    %c0_10 = arith.constant 0 : index
    %9 = vector.load %arg2[%c1_8, %c0_9, %c0_10] : memref<9x8x8xbf16, #tpu.memory_space<vmem>>, vector<1x8x8xbf16>
    %10 = vector.shape_cast %9 : vector<1x8x8xbf16> to vector<8x8xbf16>
    %cst_11 = arith.constant dense<0.000000e+00> : vector<8x512xf32>
    %11 = tpu.matmul %10, %8, %cst_11 {dimension_numbers = #tpu.dot_dimension_numbers<[1], [0], [0], [1], [0, 0, 1, 1], [], []>} : vector<8x8xbf16>, vector<8x512xbf16>, vector<8x512xf32> -> vector<8x512xf32>
    %12 = arith.addf %6, %11 : vector<8x512xf32>
    %c0_12 = arith.constant 0 : index
    %c0_13 = arith.constant 0 : index
    %c2 = arith.constant 2 : index
    %13 = vector.load %arg1[%c0_12, %c0_13, %c2] : memref<1x8x640xbf16, #tpu.memory_space<vmem>>, vector<1x8x512xbf16>
    %14 = vector.shape_cast %13 : vector<1x8x512xbf16> to vector<8x512xbf16>
    %c2_14 = arith.constant 2 : index
    %c0_15 = arith.constant 0 : index
    %c0_16 = arith.constant 0 : index
    %15 = vector.load %arg2[%c2_14, %c0_15, %c0_16] : memref<9x8x8xbf16, #tpu.memory_space<vmem>>, vector<1x8x8xbf16>
    %16 = vector.shape_cast %15 : vector<1x8x8xbf16> to vector<8x8xbf16>
    %cst_17 = arith.constant dense<0.000000e+00> : vector<8x512xf32>
    %17 = tpu.matmul %16, %14, %cst_17 {dimension_numbers = #tpu.dot_dimension_numbers<[1], [0], [0], [1], [0, 0, 1, 1], [], []>} : vector<8x8xbf16>, vector<8x512xbf16>, vector<8x512xf32> -> vector<8x512xf32>
    %18 = arith.addf %12, %17 : vector<8x512xf32>
    %c0_18 = arith.constant 0 : index
    %c0_19 = arith.constant 0 : index
    %c18 = arith.constant 18 : index
    %19 = vector.load %arg1[%c0_18, %c0_19, %c18] : memref<1x8x640xbf16, #tpu.memory_space<vmem>>, vector<1x8x512xbf16>
    %20 = vector.shape_cast %19 : vector<1x8x512xbf16> to vector<8x512xbf16>
    %c3 = arith.constant 3 : index
    %c0_20 = arith.constant 0 : index
    %c0_21 = arith.constant 0 : index
    %21 = vector.load %arg2[%c3, %c0_20, %c0_21] : memref<9x8x8xbf16, #tpu.memory_space<vmem>>, vector<1x8x8xbf16>
    %22 = vector.shape_cast %21 : vector<1x8x8xbf16> to vector<8x8xbf16>
    %cst_22 = arith.constant dense<0.000000e+00> : vector<8x512xf32>
    %23 = tpu.matmul %22, %20, %cst_22 {dimension_numbers = #tpu.dot_dimension_numbers<[1], [0], [0], [1], [0, 0, 1, 1], [], []>} : vector<8x8xbf16>, vector<8x512xbf16>, vector<8x512xf32> -> vector<8x512xf32>
    %24 = arith.addf %18, %23 : vector<8x512xf32>
    %c0_23 = arith.constant 0 : index
    %c0_24 = arith.constant 0 : index
    %c19 = arith.constant 19 : index
    %25 = vector.load %arg1[%c0_23, %c0_24, %c19] : memref<1x8x640xbf16, #tpu.memory_space<vmem>>, vector<1x8x512xbf16>
    %26 = vector.shape_cast %25 : vector<1x8x512xbf16> to vector<8x512xbf16>
    %c4 = arith.constant 4 : index
    %c0_25 = arith.constant 0 : index
    %c0_26 = arith.constant 0 : index
    %27 = vector.load %arg2[%c4, %c0_25, %c0_26] : memref<9x8x8xbf16, #tpu.memory_space<vmem>>, vector<1x8x8xbf16>
    %28 = vector.shape_cast %27 : vector<1x8x8xbf16> to vector<8x8xbf16>
    %cst_27 = arith.constant dense<0.000000e+00> : vector<8x512xf32>
    %29 = tpu.matmul %28, %26, %cst_27 {dimension_numbers = #tpu.dot_dimension_numbers<[1], [0], [0], [1], [0, 0, 1, 1], [], []>} : vector<8x8xbf16>, vector<8x512xbf16>, vector<8x512xf32> -> vector<8x512xf32>
    %30 = arith.addf %24, %29 : vector<8x512xf32>
    %c0_28 = arith.constant 0 : index
    %c0_29 = arith.constant 0 : index
    %c20 = arith.constant 20 : index
    %31 = vector.load %arg1[%c0_28, %c0_29, %c20] : memref<1x8x640xbf16, #tpu.memory_space<vmem>>, vector<1x8x512xbf16>
    %32 = vector.shape_cast %31 : vector<1x8x512xbf16> to vector<8x512xbf16>
    %c5 = arith.constant 5 : index
    %c0_30 = arith.constant 0 : index
    %c0_31 = arith.constant 0 : index
    %33 = vector.load %arg2[%c5, %c0_30, %c0_31] : memref<9x8x8xbf16, #tpu.memory_space<vmem>>, vector<1x8x8xbf16>
    %34 = vector.shape_cast %33 : vector<1x8x8xbf16> to vector<8x8xbf16>
    %cst_32 = arith.constant dense<0.000000e+00> : vector<8x512xf32>
    %35 = tpu.matmul %34, %32, %cst_32 {dimension_numbers = #tpu.dot_dimension_numbers<[1], [0], [0], [1], [0, 0, 1, 1], [], []>} : vector<8x8xbf16>, vector<8x512xbf16>, vector<8x512xf32> -> vector<8x512xf32>
    %36 = arith.addf %30, %35 : vector<8x512xf32>
    %c0_33 = arith.constant 0 : index
    %c0_34 = arith.constant 0 : index
    %c36 = arith.constant 36 : index
    %37 = vector.load %arg1[%c0_33, %c0_34, %c36] : memref<1x8x640xbf16, #tpu.memory_space<vmem>>, vector<1x8x512xbf16>
    %38 = vector.shape_cast %37 : vector<1x8x512xbf16> to vector<8x512xbf16>
    %c6 = arith.constant 6 : index
    %c0_35 = arith.constant 0 : index
    %c0_36 = arith.constant 0 : index
    %39 = vector.load %arg2[%c6, %c0_35, %c0_36] : memref<9x8x8xbf16, #tpu.memory_space<vmem>>, vector<1x8x8xbf16>
    %40 = vector.shape_cast %39 : vector<1x8x8xbf16> to vector<8x8xbf16>
    %cst_37 = arith.constant dense<0.000000e+00> : vector<8x512xf32>
    %41 = tpu.matmul %40, %38, %cst_37 {dimension_numbers = #tpu.dot_dimension_numbers<[1], [0], [0], [1], [0, 0, 1, 1], [], []>} : vector<8x8xbf16>, vector<8x512xbf16>, vector<8x512xf32> -> vector<8x512xf32>
    %42 = arith.addf %36, %41 : vector<8x512xf32>
    %c0_38 = arith.constant 0 : index
    %c0_39 = arith.constant 0 : index
    %c37 = arith.constant 37 : index
    %43 = vector.load %arg1[%c0_38, %c0_39, %c37] : memref<1x8x640xbf16, #tpu.memory_space<vmem>>, vector<1x8x512xbf16>
    %44 = vector.shape_cast %43 : vector<1x8x512xbf16> to vector<8x512xbf16>
    %c7 = arith.constant 7 : index
    %c0_40 = arith.constant 0 : index
    %c0_41 = arith.constant 0 : index
    %45 = vector.load %arg2[%c7, %c0_40, %c0_41] : memref<9x8x8xbf16, #tpu.memory_space<vmem>>, vector<1x8x8xbf16>
    %46 = vector.shape_cast %45 : vector<1x8x8xbf16> to vector<8x8xbf16>
    %cst_42 = arith.constant dense<0.000000e+00> : vector<8x512xf32>
    %47 = tpu.matmul %46, %44, %cst_42 {dimension_numbers = #tpu.dot_dimension_numbers<[1], [0], [0], [1], [0, 0, 1, 1], [], []>} : vector<8x8xbf16>, vector<8x512xbf16>, vector<8x512xf32> -> vector<8x512xf32>
    %48 = arith.addf %42, %47 : vector<8x512xf32>
    %c0_43 = arith.constant 0 : index
    %c0_44 = arith.constant 0 : index
    %c38 = arith.constant 38 : index
    %49 = vector.load %arg1[%c0_43, %c0_44, %c38] : memref<1x8x640xbf16, #tpu.memory_space<vmem>>, vector<1x8x512xbf16>
    %50 = vector.shape_cast %49 : vector<1x8x512xbf16> to vector<8x512xbf16>
    %c8 = arith.constant 8 : index
    %c0_45 = arith.constant 0 : index
    %c0_46 = arith.constant 0 : index
    %51 = vector.load %arg2[%c8, %c0_45, %c0_46] : memref<9x8x8xbf16, #tpu.memory_space<vmem>>, vector<1x8x8xbf16>
    %52 = vector.shape_cast %51 : vector<1x8x8xbf16> to vector<8x8xbf16>
    %cst_47 = arith.constant dense<0.000000e+00> : vector<8x512xf32>
    %53 = tpu.matmul %52, %50, %cst_47 {dimension_numbers = #tpu.dot_dimension_numbers<[1], [0], [0], [1], [0, 0, 1, 1], [], []>} : vector<8x8xbf16>, vector<8x512xbf16>, vector<8x512xf32> -> vector<8x512xf32>
    %54 = arith.addf %48, %53 : vector<8x512xf32>
    %c0_48 = arith.constant 0 : index
    %c0_49 = arith.constant 0 : index
    %55 = vector.load %arg4[%c0_48, %c0_49] : memref<8x1xf32, #tpu.memory_space<vmem>>, vector<8x1xf32>
    %56 = vector.broadcast %55 : vector<8x1xf32> to vector<8x512xf32>
    %57 = arith.mulf %54, %56 : vector<8x512xf32>
    %c0_50 = arith.constant 0 : index
    %c0_51 = arith.constant 0 : index
    %58 = vector.load %arg5[%c0_50, %c0_51] : memref<8x1xf32, #tpu.memory_space<vmem>>, vector<8x1xf32>
    %59 = vector.broadcast %58 : vector<8x1xf32> to vector<8x512xf32>
    %60 = arith.addf %57, %59 : vector<8x512xf32>
    %cst_52 = arith.constant 0.000000e+00 : f32
    %61 = vector.broadcast %cst_52 : f32 to vector<8x512xf32>
    %62 = arith.maximumf %60, %61 : vector<8x512xf32>
    %c0_53 = arith.constant 0 : index
    %c0_54 = arith.constant 0 : index
    %63 = vector.load %arg8[%c0_53, %c0_54] : memref<1x512xf32, #tpu.memory_space<vmem>>, vector<1x512xf32>
    %64 = vector.broadcast %63 : vector<1x512xf32> to vector<8x512xf32>
    %65 = arith.mulf %62, %64 : vector<8x512xf32>
    %66 = arith.truncf %65 : vector<8x512xf32> to vector<8x512xbf16>
    %c0_55 = arith.constant 0 : index
    %c0_56 = arith.constant 0 : index
    %67 = vector.load %arg10[%c0_55, %c0_56] : memref<8x512xbf16, #tpu.memory_space<vmem>>, vector<8x512xbf16>
    tpu.vector_store %arg10[%c0_55, %c0_56], %66 {strides = array<i32>} : memref<8x512xbf16, #tpu.memory_space<vmem>>, vector<8x512xbf16>,
    %cst_57 = arith.constant 0.000000e+00 : f32
    %68 = vector.broadcast %cst_57 : f32 to vector<8x384xf32>
    %c0_58 = arith.constant 0 : index
    %c0_59 = arith.constant 0 : index
    %69 = vector.load %arg10[%c0_58, %c0_59] : memref<8x512xbf16, #tpu.memory_space<vmem>>, vector<8x384xbf16>
    %c0_60 = arith.constant 0 : index
    %c0_61 = arith.constant 0 : index
    %c0_62 = arith.constant 0 : index
    %70 = vector.load %arg3[%c0_60, %c0_61, %c0_62] : memref<9x8x8xbf16, #tpu.memory_space<vmem>>, vector<1x8x8xbf16>
    %71 = vector.shape_cast %70 : vector<1x8x8xbf16> to vector<8x8xbf16>
    %cst_63 = arith.constant dense<0.000000e+00> : vector<8x384xf32>
    %72 = tpu.matmul %71, %69, %cst_63 {dimension_numbers = #tpu.dot_dimension_numbers<[1], [0], [0], [1], [0, 0, 1, 1], [], []>} : vector<8x8xbf16>, vector<8x384xbf16>, vector<8x384xf32> -> vector<8x384xf32>
    %73 = arith.addf %68, %72 : vector<8x384xf32>
    %c0_64 = arith.constant 0 : index
    %c1_65 = arith.constant 1 : index
    %74 = vector.load %arg10[%c0_64, %c1_65] : memref<8x512xbf16, #tpu.memory_space<vmem>>, vector<8x384xbf16>
    %c1_66 = arith.constant 1 : index
    %c0_67 = arith.constant 0 : index
    %c0_68 = arith.constant 0 : index
    %75 = vector.load %arg3[%c1_66, %c0_67, %c0_68] : memref<9x8x8xbf16, #tpu.memory_space<vmem>>, vector<1x8x8xbf16>
    %76 = vector.shape_cast %75 : vector<1x8x8xbf16> to vector<8x8xbf16>
    %cst_69 = arith.constant dense<0.000000e+00> : vector<8x384xf32>
    %77 = tpu.matmul %76, %74, %cst_69 {dimension_numbers = #tpu.dot_dimension_numbers<[1], [0], [0], [1], [0, 0, 1, 1], [], []>} : vector<8x8xbf16>, vector<8x384xbf16>, vector<8x384xf32> -> vector<8x384xf32>
    %78 = arith.addf %73, %77 : vector<8x384xf32>
    %c0_70 = arith.constant 0 : index
    %c2_71 = arith.constant 2 : index
    %79 = vector.load %arg10[%c0_70, %c2_71] : memref<8x512xbf16, #tpu.memory_space<vmem>>, vector<8x384xbf16>
    %c2_72 = arith.constant 2 : index
    %c0_73 = arith.constant 0 : index
    %c0_74 = arith.constant 0 : index
    %80 = vector.load %arg3[%c2_72, %c0_73, %c0_74] : memref<9x8x8xbf16, #tpu.memory_space<vmem>>, vector<1x8x8xbf16>
    %81 = vector.shape_cast %80 : vector<1x8x8xbf16> to vector<8x8xbf16>
    %cst_75 = arith.constant dense<0.000000e+00> : vector<8x384xf32>
    %82 = tpu.matmul %81, %79, %cst_75 {dimension_numbers = #tpu.dot_dimension_numbers<[1], [0], [0], [1], [0, 0, 1, 1], [], []>} : vector<8x8xbf16>, vector<8x384xbf16>, vector<8x384xf32> -> vector<8x384xf32>
    %83 = arith.addf %78, %82 : vector<8x384xf32>
    %c0_76 = arith.constant 0 : index
    %c18_77 = arith.constant 18 : index
    %84 = vector.load %arg10[%c0_76, %c18_77] : memref<8x512xbf16, #tpu.memory_space<vmem>>, vector<8x384xbf16>
    %c3_78 = arith.constant 3 : index
    %c0_79 = arith.constant 0 : index
    %c0_80 = arith.constant 0 : index
    %85 = vector.load %arg3[%c3_78, %c0_79, %c0_80] : memref<9x8x8xbf16, #tpu.memory_space<vmem>>, vector<1x8x8xbf16>
    %86 = vector.shape_cast %85 : vector<1x8x8xbf16> to vector<8x8xbf16>
    %cst_81 = arith.constant dense<0.000000e+00> : vector<8x384xf32>
    %87 = tpu.matmul %86, %84, %cst_81 {dimension_numbers = #tpu.dot_dimension_numbers<[1], [0], [0], [1], [0, 0, 1, 1], [], []>} : vector<8x8xbf16>, vector<8x384xbf16>, vector<8x384xf32> -> vector<8x384xf32>
    %88 = arith.addf %83, %87 : vector<8x384xf32>
    %c0_82 = arith.constant 0 : index
    %c19_83 = arith.constant 19 : index
    %89 = vector.load %arg10[%c0_82, %c19_83] : memref<8x512xbf16, #tpu.memory_space<vmem>>, vector<8x384xbf16>
    %c4_84 = arith.constant 4 : index
    %c0_85 = arith.constant 0 : index
    %c0_86 = arith.constant 0 : index
    %90 = vector.load %arg3[%c4_84, %c0_85, %c0_86] : memref<9x8x8xbf16, #tpu.memory_space<vmem>>, vector<1x8x8xbf16>
    %91 = vector.shape_cast %90 : vector<1x8x8xbf16> to vector<8x8xbf16>
    %cst_87 = arith.constant dense<0.000000e+00> : vector<8x384xf32>
    %92 = tpu.matmul %91, %89, %cst_87 {dimension_numbers = #tpu.dot_dimension_numbers<[1], [0], [0], [1], [0, 0, 1, 1], [], []>} : vector<8x8xbf16>, vector<8x384xbf16>, vector<8x384xf32> -> vector<8x384xf32>
    %93 = arith.addf %88, %92 : vector<8x384xf32>
    %c0_88 = arith.constant 0 : index
    %c20_89 = arith.constant 20 : index
    %94 = vector.load %arg10[%c0_88, %c20_89] : memref<8x512xbf16, #tpu.memory_space<vmem>>, vector<8x384xbf16>
    %c5_90 = arith.constant 5 : index
    %c0_91 = arith.constant 0 : index
    %c0_92 = arith.constant 0 : index
    %95 = vector.load %arg3[%c5_90, %c0_91, %c0_92] : memref<9x8x8xbf16, #tpu.memory_space<vmem>>, vector<1x8x8xbf16>
    %96 = vector.shape_cast %95 : vector<1x8x8xbf16> to vector<8x8xbf16>
    %cst_93 = arith.constant dense<0.000000e+00> : vector<8x384xf32>
    %97 = tpu.matmul %96, %94, %cst_93 {dimension_numbers = #tpu.dot_dimension_numbers<[1], [0], [0], [1], [0, 0, 1, 1], [], []>} : vector<8x8xbf16>, vector<8x384xbf16>, vector<8x384xf32> -> vector<8x384xf32>
    %98 = arith.addf %93, %97 : vector<8x384xf32>
    %c0_94 = arith.constant 0 : index
    %c36_95 = arith.constant 36 : index
    %99 = vector.load %arg10[%c0_94, %c36_95] : memref<8x512xbf16, #tpu.memory_space<vmem>>, vector<8x384xbf16>
    %c6_96 = arith.constant 6 : index
    %c0_97 = arith.constant 0 : index
    %c0_98 = arith.constant 0 : index
    %100 = vector.load %arg3[%c6_96, %c0_97, %c0_98] : memref<9x8x8xbf16, #tpu.memory_space<vmem>>, vector<1x8x8xbf16>
    %101 = vector.shape_cast %100 : vector<1x8x8xbf16> to vector<8x8xbf16>
    %cst_99 = arith.constant dense<0.000000e+00> : vector<8x384xf32>
    %102 = tpu.matmul %101, %99, %cst_99 {dimension_numbers = #tpu.dot_dimension_numbers<[1], [0], [0], [1], [0, 0, 1, 1], [], []>} : vector<8x8xbf16>, vector<8x384xbf16>, vector<8x384xf32> -> vector<8x384xf32>
    %103 = arith.addf %98, %102 : vector<8x384xf32>
    %c0_100 = arith.constant 0 : index
    %c37_101 = arith.constant 37 : index
    %104 = vector.load %arg10[%c0_100, %c37_101] : memref<8x512xbf16, #tpu.memory_space<vmem>>, vector<8x384xbf16>
    %c7_102 = arith.constant 7 : index
    %c0_103 = arith.constant 0 : index
    %c0_104 = arith.constant 0 : index
    %105 = vector.load %arg3[%c7_102, %c0_103, %c0_104] : memref<9x8x8xbf16, #tpu.memory_space<vmem>>, vector<1x8x8xbf16>
    %106 = vector.shape_cast %105 : vector<1x8x8xbf16> to vector<8x8xbf16>
    %cst_105 = arith.constant dense<0.000000e+00> : vector<8x384xf32>
    %107 = tpu.matmul %106, %104, %cst_105 {dimension_numbers = #tpu.dot_dimension_numbers<[1], [0], [0], [1], [0, 0, 1, 1], [], []>} : vector<8x8xbf16>, vector<8x384xbf16>, vector<8x384xf32> -> vector<8x384xf32>
    %108 = arith.addf %103, %107 : vector<8x384xf32>
    %c0_106 = arith.constant 0 : index
    %c38_107 = arith.constant 38 : index
    %109 = vector.load %arg10[%c0_106, %c38_107] : memref<8x512xbf16, #tpu.memory_space<vmem>>, vector<8x384xbf16>
    %c8_108 = arith.constant 8 : index
    %c0_109 = arith.constant 0 : index
    %c0_110 = arith.constant 0 : index
    %110 = vector.load %arg3[%c8_108, %c0_109, %c0_110] : memref<9x8x8xbf16, #tpu.memory_space<vmem>>, vector<1x8x8xbf16>
    %111 = vector.shape_cast %110 : vector<1x8x8xbf16> to vector<8x8xbf16>
    %cst_111 = arith.constant dense<0.000000e+00> : vector<8x384xf32>
    %112 = tpu.matmul %111, %109, %cst_111 {dimension_numbers = #tpu.dot_dimension_numbers<[1], [0], [0], [1], [0, 0, 1, 1], [], []>} : vector<8x8xbf16>, vector<8x384xbf16>, vector<8x384xf32> -> vector<8x384xf32>
    %113 = arith.addf %108, %112 : vector<8x384xf32>
    %c0_112 = arith.constant 0 : index
    %c0_113 = arith.constant 0 : index
    %114 = vector.load %arg6[%c0_112, %c0_113] : memref<8x1xf32, #tpu.memory_space<vmem>>, vector<8x1xf32>
    %115 = vector.broadcast %114 : vector<8x1xf32> to vector<8x384xf32>
    %116 = arith.mulf %113, %115 : vector<8x384xf32>
    %c0_114 = arith.constant 0 : index
    %c0_115 = arith.constant 0 : index
    %117 = vector.load %arg7[%c0_114, %c0_115] : memref<8x1xf32, #tpu.memory_space<vmem>>, vector<8x1xf32>
    %118 = vector.broadcast %117 : vector<8x1xf32> to vector<8x384xf32>
    %119 = arith.addf %116, %118 : vector<8x384xf32>
    %c0_116 = arith.constant 0 : index
    %c0_117 = arith.constant 0 : index
    %c38_118 = arith.constant 38 : index
    %120 = vector.load %arg1[%c0_116, %c0_117, %c38_118] : memref<1x8x640xbf16, #tpu.memory_space<vmem>>, vector<1x8x384xbf16>
    %121 = vector.shape_cast %120 : vector<1x8x384xbf16> to vector<8x384xbf16>
    %122 = arith.extf %121 : vector<8x384xbf16> to vector<8x384xf32>
    %123 = arith.addf %119, %122 : vector<8x384xf32>
    %cst_119 = arith.constant 0.000000e+00 : f32
    %124 = vector.broadcast %cst_119 : f32 to vector<8x384xf32>
    %125 = arith.maximumf %123, %124 : vector<8x384xf32>
    %126 = arith.truncf %125 : vector<8x384xf32> to vector<8x384xbf16>
    %c0_120 = arith.constant 0 : index
    %c0_121 = arith.constant 0 : index
    %c0_122 = arith.constant 0 : index
    %127 = vector.load %arg9[%c0_120, %c0_121, %c0_122] : memref<1x8x384xbf16, #tpu.memory_space<vmem>>, vector<1x8x384xbf16>
    %128 = vector.shape_cast %127 : vector<1x8x384xbf16> to vector<8x384xbf16>
    %129 = vector.shape_cast %126 : vector<8x384xbf16> to vector<1x8x384xbf16>
    tpu.vector_store %arg9[%c0_120, %c0_121, %c0_122], %129 {strides = array<i32>} : memref<1x8x384xbf16, #tpu.memory_space<vmem>>, vector<1x8x384xbf16>,
    return
  }
  func.func @transform_0(%arg0: i32) -> (i32, i32, i32) {
    %c0_i32 = arith.constant 0 : i32
    %c0_i32_0 = arith.constant 0 : i32
    %c0_i32_1 = arith.constant 0 : i32
    return %arg0, %c0_i32, %c0_i32_0 : i32, i32, i32
  }
  func.func @transform_1(%arg0: i32) -> (i32, i32, i32) {
    %c0_i32 = arith.constant 0 : i32
    %c0_i32_0 = arith.constant 0 : i32
    %c0_i32_1 = arith.constant 0 : i32
    %c0_i32_2 = arith.constant 0 : i32
    return %c0_i32, %c0_i32_0, %c0_i32_1 : i32, i32, i32
  }
  func.func @transform_2(%arg0: i32) -> (i32, i32, i32) {
    %c0_i32 = arith.constant 0 : i32
    %c0_i32_0 = arith.constant 0 : i32
    %c0_i32_1 = arith.constant 0 : i32
    %c0_i32_2 = arith.constant 0 : i32
    return %c0_i32, %c0_i32_0, %c0_i32_1 : i32, i32, i32
  }
  func.func @transform_3(%arg0: i32) -> (i32, i32) {
    %c0_i32 = arith.constant 0 : i32
    %c0_i32_0 = arith.constant 0 : i32
    %c0_i32_1 = arith.constant 0 : i32
    return %c0_i32, %c0_i32_0 : i32, i32
  }
  func.func @transform_4(%arg0: i32) -> (i32, i32) {
    %c0_i32 = arith.constant 0 : i32
    %c0_i32_0 = arith.constant 0 : i32
    %c0_i32_1 = arith.constant 0 : i32
    return %c0_i32, %c0_i32_0 : i32, i32
  }
  func.func @transform_5(%arg0: i32) -> (i32, i32) {
    %c0_i32 = arith.constant 0 : i32
    %c0_i32_0 = arith.constant 0 : i32
    %c0_i32_1 = arith.constant 0 : i32
    return %c0_i32, %c0_i32_0 : i32, i32
  }
  func.func @transform_6(%arg0: i32) -> (i32, i32) {
    %c0_i32 = arith.constant 0 : i32
    %c0_i32_0 = arith.constant 0 : i32
    %c0_i32_1 = arith.constant 0 : i32
    return %c0_i32, %c0_i32_0 : i32, i32
  }
  func.func @transform_7(%arg0: i32) -> (i32, i32) {
    %c0_i32 = arith.constant 0 : i32
    %c0_i32_0 = arith.constant 0 : i32
    %c0_i32_1 = arith.constant 0 : i32
    return %c0_i32, %c0_i32_0 : i32, i32
  }
  func.func @transform_8(%arg0: i32) -> (i32, i32, i32) {
    %c0_i32 = arith.constant 0 : i32
    %c0_i32_0 = arith.constant 0 : i32
    %c0_i32_1 = arith.constant 0 : i32
    return %arg0, %c0_i32, %c0_i32_0 : i32, i32, i32
  }
}

</mosaic_0001>

<llo_original>
// kernel: tpu_custom_call.1
$region0: #{tpu_custom_call.1}
  #allocation0 [shape = 'u32[]', space=smem, size = 0x4, offset = 0x4, fixed_abs, tag = 'smem constant byte address 0x4 - core index']
  #allocation1 [shape = 'u32[72,128]{1,0:T(1,128)}', space=vmem, size = 0x9000, scoped, tag = 'internal scratch']
  #allocation2 [shape = 'bf16[8,512]{1,0:T(8,128)(2,1)}', space=vmem, size = 0x2000, scoped, tag = 'scratch operand']
  %s0 = inlined_call_operand.vmem [shape: bf16[2,8,640], index: 0, kind: input, shape index: {}]
  %s1 = inlined_call_operand.vmem [shape: bf16[9,8,8], index: 1, kind: input, shape index: {}]
  %s2 = inlined_call_operand.vmem [shape: bf16[9,8,8], index: 2, kind: input, shape index: {}]
  %s3 = inlined_call_operand.vmem [shape: f32[8,1], index: 3, kind: input, shape index: {}]
  %s4 = inlined_call_operand.vmem [shape: f32[8,1], index: 4, kind: input, shape index: {}]
  %s5 = inlined_call_operand.vmem [shape: f32[8,1], index: 5, kind: input, shape index: {}]
  %s6 = inlined_call_operand.vmem [shape: f32[8,1], index: 6, kind: input, shape index: {}]
  %s7 = inlined_call_operand.vmem [shape: f32[1,512], index: 7, kind: input, shape index: {}]
  %s8 = inlined_call_operand.hbm [shape: bf16[2,8,384], index: 8, kind: output, shape index: {}]
  %s9 = sld [smem:[#allocation0]]
  $region65: #{tpu_custom_call.1} parent=0
    _
  %s11 = ssub.s32 1, %s9
  %s12 = scalar_select 0, %s11, %s9
  $region1: #{tpu_custom_call.1} parent=0
    #allocation3 [shape = 'u8[12288]{0}', space=vmem, size = 0x3000, scoped, tag = 'output window, operand 0']
    #allocation4 [shape = 's32[2]{0}', space=sflag, size = 0x8, scoped, tag = 'scoped memory for tpu_custom_call.1']
    %13 = vsyncpa [#allocation4], 0
    %s14 = scalar_lea.sflag [#allocation4], 1
    %15 = vsyncpa %s14, 0
    loop: start=0, step=1, limit=4
    $region2: #{tpu_custom_call.1} parent=1 // loop_pre_header
      _
    $region3: #{tpu_custom_call.1} parent=1 // loop_header
      %s17 = sphi 0, %s21
      %p18 = scmp.ge.s32.totalorder %s17, 4
      %s27 = sphi 0, %s29
      %s30 = sphi 0, %s27
      %s31 = sphi 0, %s30
      %s47 = sphi 0, %s31
      %s51 = sphi 0, %s51
      %s53 = sphi 0, %s51
      %s54 = sphi 0, %s53
      %s68 = sphi 0, %s54
      %s72 = sphi 0, %s72
      %s74 = sphi 0, %s72
      %s75 = sphi 0, %s74
      %s89 = sphi 0, %s75
      %s93 = sphi 0, %s93
      %s95 = sphi 0, %s93
      %s96 = sphi 0, %s95
      %s110 = sphi 0, %s96
      %s114 = sphi 0, %s114
      %s116 = sphi 0, %s114
      %s117 = sphi 0, %s116
      %s131 = sphi 0, %s117
      %s135 = sphi 0, %s135
      %s137 = sphi 0, %s135
      %s138 = sphi 0, %s137
      %s152 = sphi 0, %s138
      %s156 = sphi 0, %s156
      %s158 = sphi 0, %s156
      %s159 = sphi 0, %s158
      %s173 = sphi 0, %s159
      %s177 = sphi 0, %s177
      %s179 = sphi 0, %s177
      %s180 = sphi 0, %s179
      %s194 = sphi 0, %s180
      %s200 = sphi 0, %s202
      %s203 = sphi 0, %s200
      %s204 = sphi 0, %s203
      %s220 = sphi 0, %s204
    $region4: #{tpu_custom_call.1} parent=1 // loop_header_branch
      %20 = sbr.rel (%p18) target = $region8
    $region5: #{tpu_custom_call.1} parent=1 // loop_body
      %s22 = ssub.s32 %s17, 1
      %s23 = ssub.s32 %s17, 2
      %s24 = sadd.s32 %s17, 1
      %s25 = ssub.s32 %s17, %s24
      %p26 = scmp.eq.s32.totalorder %s25, 0
      %s28 = sadd.s32 %s27, 1
      %s29 = scalar_select %p26, %s27, %s28
      %p32 = pneg %p26
      %p33 = scmp.eq.s32.totalorder %s17, 1
      %p34 = por %p32, %p33
      %p35 = scmp.ne.s32.totalorder %s27, %s30
      %p36 = scmp.eq.s32.totalorder %s17, 0
      %p37 = por %p35, %p36
      %p38 = scmp.ne.s32.totalorder %s27, %s30
      %p39 = scmp.eq.s32.totalorder %s22, 1
      %p40 = por %p38, %p39
      %p41 = scmp.ne.s32.totalorder %s30, %s31
      %p42 = scmp.eq.s32.totalorder %s22, 0
      %p43 = por %p41, %p42
      %p44 = scmp.ne.s32.totalorder %s30, %s31
      %p45 = scmp.eq.s32.totalorder %s23, 1
      %p46 = por %p44, %p45
      %p48 = scmp.ne.s32.totalorder %s31, %s47
      %p49 = scmp.eq.s32.totalorder %s23, 0
      %p50 = por %p48, %p49
      %s52 = sadd.s32 %s51, 1
      %p55 = scmp.eq.s32.totalorder %s17, 1
      %p56 = scmp.ne.s32.totalorder %s51, %s53
      %p57 = scmp.eq.s32.totalorder %s17, 0
      %p58 = por %p56, %p57
      %p59 = scmp.ne.s32.totalorder %s51, %s53
      %p60 = scmp.eq.s32.totalorder %s22, 1
      %p61 = por %p59, %p60
      %p62 = scmp.ne.s32.totalorder %s53, %s54
      %p63 = scmp.eq.s32.totalorder %s22, 0
      %p64 = por %p62, %p63
      %p65 = scmp.ne.s32.totalorder %s53, %s54
      %p66 = scmp.eq.s32.totalorder %s23, 1
      %p67 = por %p65, %p66
      %p69 = scmp.ne.s32.totalorder %s54, %s68
      %p70 = scmp.eq.s32.totalorder %s23, 0
      %p71 = por %p69, %p70
      %s73 = sadd.s32 %s72, 1
      %p76 = scmp.eq.s32.totalorder %s17, 1
      %p77 = scmp.ne.s32.totalorder %s72, %s74
      %p78 = scmp.eq.s32.totalorder %s17, 0
      %p79 = por %p77, %p78
      %p80 = scmp.ne.s32.totalorder %s72, %s74
      %p81 = scmp.eq.s32.totalorder %s22, 1
      %p82 = por %p80, %p81
      %p83 = scmp.ne.s32.totalorder %s74, %s75
      %p84 = scmp.eq.s32.totalorder %s22, 0
      %p85 = por %p83, %p84
      %p86 = scmp.ne.s32.totalorder %s74, %s75
      %p87 = scmp.eq.s32.totalorder %s23, 1
      %p88 = por %p86, %p87
      %p90 = scmp.ne.s32.totalorder %s75, %s89
      %p91 = scmp.eq.s32.totalorder %s23, 0
      %p92 = por %p90, %p91
      %s94 = sadd.s32 %s93, 1
      %p97 = scmp.eq.s32.totalorder %s17, 1
      %p98 = scmp.ne.s32.totalorder %s93, %s95
      %p99 = scmp.eq.s32.totalorder %s17, 0
      %p100 = por %p98, %p99
      %p101 = scmp.ne.s32.totalorder %s93, %s95
      %p102 = scmp.eq.s32.totalorder %s22, 1
      %p103 = por %p101, %p102
      %p104 = scmp.ne.s32.totalorder %s95, %s96
      %p105 = scmp.eq.s32.totalorder %s22, 0
      %p106 = por %p104, %p105
      %p107 = scmp.ne.s32.totalorder %s95, %s96
      %p108 = scmp.eq.s32.totalorder %s23, 1
      %p109 = por %p107, %p108
      %p111 = scmp.ne.s32.totalorder %s96, %s110
      %p112 = scmp.eq.s32.totalorder %s23, 0
      %p113 = por %p111, %p112
      %s115 = sadd.s32 %s114, 1
      %p118 = scmp.eq.s32.totalorder %s17, 1
      %p119 = scmp.ne.s32.totalorder %s114, %s116
      %p120 = scmp.eq.s32.totalorder %s17, 0
      %p121 = por %p119, %p120
      %p122 = scmp.ne.s32.totalorder %s114, %s116
      %p123 = scmp.eq.s32.totalorder %s22, 1
      %p124 = por %p122, %p123
      %p125 = scmp.ne.s32.totalorder %s116, %s117
      %p126 = scmp.eq.s32.totalorder %s22, 0
      %p127 = por %p125, %p126
      %p128 = scmp.ne.s32.totalorder %s116, %s117
      %p129 = scmp.eq.s32.totalorder %s23, 1
      %p130 = por %p128, %p129
      %p132 = scmp.ne.s32.totalorder %s117, %s131
      %p133 = scmp.eq.s32.totalorder %s23, 0
      %p134 = por %p132, %p133
      %s136 = sadd.s32 %s135, 1
      %p139 = scmp.eq.s32.totalorder %s17, 1
      %p140 = scmp.ne.s32.totalorder %s135, %s137
      %p141 = scmp.eq.s32.totalorder %s17, 0
      %p142 = por %p140, %p141
      %p143 = scmp.ne.s32.totalorder %s135, %s137
      %p144 = scmp.eq.s32.totalorder %s22, 1
      %p145 = por %p143, %p144
      %p146 = scmp.ne.s32.totalorder %s137, %s138
      %p147 = scmp.eq.s32.totalorder %s22, 0
      %p148 = por %p146, %p147
      %p149 = scmp.ne.s32.totalorder %s137, %s138
      %p150 = scmp.eq.s32.totalorder %s23, 1
      %p151 = por %p149, %p150
      %p153 = scmp.ne.s32.totalorder %s138, %s152
      %p154 = scmp.eq.s32.totalorder %s23, 0
      %p155 = por %p153, %p154
      %s157 = sadd.s32 %s156, 1
      %p160 = scmp.eq.s32.totalorder %s17, 1
      %p161 = scmp.ne.s32.totalorder %s156, %s158
      %p162 = scmp.eq.s32.totalorder %s17, 0
      %p163 = por %p161, %p162
      %p164 = scmp.ne.s32.totalorder %s156, %s158
      %p165 = scmp.eq.s32.totalorder %s22, 1
      %p166 = por %p164, %p165
      %p167 = scmp.ne.s32.totalorder %s158, %s159
      %p168 = scmp.eq.s32.totalorder %s22, 0
      %p169 = por %p167, %p168
      %p170 = scmp.ne.s32.totalorder %s158, %s159
      %p171 = scmp.eq.s32.totalorder %s23, 1
      %p172 = por %p170, %p171
      %p174 = scmp.ne.s32.totalorder %s159, %s173
      %p175 = scmp.eq.s32.totalorder %s23, 0
      %p176 = por %p174, %p175
      %s178 = sadd.s32 %s177, 1
      %p181 = scmp.eq.s32.totalorder %s17, 1
      %p182 = scmp.ne.s32.totalorder %s177, %s179
      %p183 = scmp.eq.s32.totalorder %s17, 0
      %p184 = por %p182, %p183
      %p185 = scmp.ne.s32.totalorder %s177, %s179
      %p186 = scmp.eq.s32.totalorder %s22, 1
      %p187 = por %p185, %p186
      %p188 = scmp.ne.s32.totalorder %s179, %s180
      %p189 = scmp.eq.s32.totalorder %s22, 0
      %p190 = por %p188, %p189
      %p191 = scmp.ne.s32.totalorder %s179, %s180
      %p192 = scmp.eq.s32.totalorder %s23, 1
      %p193 = por %p191, %p192
      %p195 = scmp.ne.s32.totalorder %s180, %s194
      %p196 = scmp.eq.s32.totalorder %s23, 0
      %p197 = por %p195, %p196
      %s198 = ssub.s32 %s17, %s24
      %p199 = scmp.eq.s32.totalorder %s198, 0
      %s201 = sadd.s32 %s200, 1
      %s202 = scalar_select %p199, %s200, %s201
      %p205 = pneg %p199
      %p206 = scmp.eq.s32.totalorder %s17, 1
      %p207 = por %p205, %p206
      %p208 = scmp.ne.s32.totalorder %s200, %s203
      %p209 = scmp.eq.s32.totalorder %s17, 0
      %p210 = por %p208, %p209
      %p211 = scmp.ne.s32.totalorder %s200, %s203
      %p212 = scmp.eq.s32.totalorder %s22, 1
      %p213 = por %p211, %p212
      %p214 = scmp.ne.s32.totalorder %s203, %s204
      %p215 = scmp.eq.s32.totalorder %s22, 0
      %p216 = por %p214, %p215
      %p217 = scmp.ne.s32.totalorder %s203, %s204
      %p218 = scmp.eq.s32.totalorder %s23, 1
      %p219 = por %p217, %p218
      %p221 = scmp.ne.s32.totalorder %s204, %s220
      %p222 = scmp.eq.s32.totalorder %s23, 0
      %p223 = por %p221, %p222
      %p224 = scmp.le.s32.totalorder 1, %s17
      %p225 = scmp.lt.s32.totalorder %s17, 3
      %p226 = pnand %p224, %p225
      %p227 = pneg %p226
      // Predicated region
      $region9: #{tpu_custom_call.1} parent=5 // pred_check
        _
      $region10: #{tpu_custom_call.1} parent=5 // pred_check_branch
        %229 = sbr.rel (%p226) target = $region12
      $region11: #{tpu_custom_call.1} parent=5 // pred_region
        %s230 = ssub.s32 %s17, 1
        // Predicated region
        $region13: #{tpu_custom_call.1} parent=11 // pred_check
          %p231 = pneg %p64
        $region14: #{tpu_custom_call.1} parent=11 // pred_check_branch
          %233 = sbr.rel (%p231) target = $region16
        $region15: #{tpu_custom_call.1} parent=11 // pred_region
          _
        $region16: #{tpu_custom_call.1} parent=11 // pred_fallthru
          _
        // Predicated region
        $region17: #{tpu_custom_call.1} parent=11 // pred_check
          %p234 = pneg %p85
        $region18: #{tpu_custom_call.1} parent=11 // pred_check_branch
          %236 = sbr.rel (%p234) target = $region20
        $region19: #{tpu_custom_call.1} parent=11 // pred_region
          _
        $region20: #{tpu_custom_call.1} parent=11 // pred_fallthru
          _
        // Predicated region
        $region21: #{tpu_custom_call.1} parent=11 // pred_check
          %p237 = pneg %p106
        $region22: #{tpu_custom_call.1} parent=11 // pred_check_branch
          %239 = sbr.rel (%p237) target = $region24
        $region23: #{tpu_custom_call.1} parent=11 // pred_region
          _
        $region24: #{tpu_custom_call.1} parent=11 // pred_fallthru
          _
        // Predicated region
        $region25: #{tpu_custom_call.1} parent=11 // pred_check
          %p240 = pneg %p127
        $region26: #{tpu_custom_call.1} parent=11 // pred_check_branch
          %242 = sbr.rel (%p240) target = $region28
        $region27: #{tpu_custom_call.1} parent=11 // pred_region
          _
        $region28: #{tpu_custom_call.1} parent=11 // pred_fallthru
          _
        // Predicated region
        $region29: #{tpu_custom_call.1} parent=11 // pred_check
          %p243 = pneg %p148
        $region30: #{tpu_custom_call.1} parent=11 // pred_check_branch
          %245 = sbr.rel (%p243) target = $region32
        $region31: #{tpu_custom_call.1} parent=11 // pred_region
          _
        $region32: #{tpu_custom_call.1} parent=11 // pred_fallthru
          _
        // Predicated region
        $region33: #{tpu_custom_call.1} parent=11 // pred_check
          %p246 = pneg %p169
        $region34: #{tpu_custom_call.1} parent=11 // pred_check_branch
          %248 = sbr.rel (%p246) target = $region36
        $region35: #{tpu_custom_call.1} parent=11 // pred_region
          _
        $region36: #{tpu_custom_call.1} parent=11 // pred_fallthru
          _
        // Predicated region
        $region37: #{tpu_custom_call.1} parent=11 // pred_check
          %p249 = pneg %p190
        $region38: #{tpu_custom_call.1} parent=11 // pred_check_branch
          %251 = sbr.rel (%p249) target = $region40
        $region39: #{tpu_custom_call.1} parent=11 // pred_region
          _
        $region40: #{tpu_custom_call.1} parent=11 // pred_fallthru
          _
      $region12: #{tpu_custom_call.1} parent=5 // pred_fallthru
        _
      %p252 = scmp.lt.s32.totalorder %s17, 2
      // Predicated region
      $region41: #{tpu_custom_call.1} parent=5 // pred_check
        %p253 = pneg %p252
      $region42: #{tpu_custom_call.1} parent=5 // pred_check_branch
        %255 = sbr.rel (%p253) target = $region44
      $region43: #{tpu_custom_call.1} parent=5 // pred_region
        // Predicated region
        $region45: #{tpu_custom_call.1} parent=43 // pred_check
          %p256 = pneg %p37
        $region46: #{tpu_custom_call.1} parent=43 // pred_check_branch
          %258 = sbr.rel (%p256) target = $region48
        $region47: #{tpu_custom_call.1} parent=43 // pred_region
          %p259 = scmp.lt.s32.totalorder %s17, 1
          %s260 = scalar_select %p259, %s17, 1
          %s261 = smul.addr %s260, 5
          %s262 = smul.addr %s261, 4
          %s263 = scalar_lea.vmem %s0, %s262
        $region48: #{tpu_custom_call.1} parent=43 // pred_fallthru
          _
      $region44: #{tpu_custom_call.1} parent=5 // pred_fallthru
        _
      %p264 = scmp.le.s32.totalorder 1, %s17
      %p265 = scmp.lt.s32.totalorder %s17, 3
      %p266 = pnand %p264, %p265
      %p267 = pneg %p266
      // Predicated region
      $region49: #{tpu_custom_call.1} parent=5 // pred_check
        _
      $region50: #{tpu_custom_call.1} parent=5 // pred_check_branch
        %269 = sbr.rel (%p266) target = $region52
      $region51: #{tpu_custom_call.1} parent=5 // pred_region
        %s270 = ssub.s32 %s17, 1
        %p271 = scmp.lt.s32.totalorder %s22, 1
        %s272 = scalar_select %p271, %s22, 1
        %s273 = smul.addr %s272, 5
        %s274 = smul.addr %s273, 4
        %s275 = scalar_lea.vmem %s0, %s274
        %p276 = pneg %p43
        %p277 = pneg %p40
        %p278 = pneg %p64
        %p279 = pneg %p61
        %p280 = pneg %p85
        %p281 = pneg %p82
        %p282 = pneg %p106
        %p283 = pneg %p103
        %p284 = pneg %p127
        %p285 = pneg %p124
        %p286 = pneg %p148
        %p287 = pneg %p145
        %p288 = pneg %p169
        %p289 = pneg %p166
        %p290 = pneg %p190
        %p291 = pneg %p187
        %p292 = pneg %p216
        %p293 = pneg %p213
        %s294 = sand.u32 %s203, 1
        %s295 = scalar_lea.sflag [#allocation4], %s294
        %s296 = sand.u32 %s203, 1
        %s297 = smul.addr %s296, 12
        %s298 = scalar_lea.vmem [#allocation3], %s297
        %p299 = scmp.lt.s32.totalorder %s22, 1
        %s300 = scalar_select %p299, %s22, 1
        %s301 = smul.addr %s300, 5
        %s302 = smul.addr %s301, 4
        %s303 = scalar_lea.vmem %s0, %s302
        %v305 = vld [vmem:[%s303] sm:$0xff]
        %v306 = vld [vmem:[%s303 + $0x8] sm:$0xff]
        %v307 = vld [vmem:[%s1] sm:$0xf]
        %v308 = vld [vmem:[%s303] sm:$0xff]
        %v309 = vld [vmem:[%s303 + $0x8] sm:$0xff]
        %v310 = vld [vmem:[%s303 + $0x10] sm:$0xf]
        %s311 = scalar_lea.vmem %s1, 4
        %v312 = vld [vmem:[%s311] sm:$0xf]
        %v316 = vunpack.c.l.b16 %v308
        %v317 = vunpack.c.h.b16 %v308
        %v318 = vunpack.c.l.b16 %v309
        %v319 = vunpack.c.h.b16 %v309
        %v320 = vunpack.c.l.b16 %v310
        %v321 = vpack.c.b16 %v316, %v316
        %v322 = vpack.c.b16 %v317, %v317
        %v323 = vpack.c.b16 %v318, %v318
        %v324 = vpack.c.b16 %v319, %v319
        %v325 = vpack.c.b16 %v320, %v320
        %326 = vrot.lane.b32.xlu0 %v321, 127
        %v327 = vpop.permute.xlu0 %326
        %328 = vrot.lane.b32.xlu0 %v322, 127
        %v329 = vpop.permute.xlu0 %328
        %330 = vrot.lane.b32.xlu0 %v323, 127
        %v331 = vpop.permute.xlu0 %330
        %332 = vrot.lane.b32.xlu0 %v324, 127
        %v333 = vpop.permute.xlu0 %332
        %334 = vrot.lane.b32.xlu0 %v325, 127
        %v335 = vpop.permute.xlu0 %334
        %vm336 = vcmask 1039360
        %v337 = vsel %vm336, %v327, %v329
        %v338 = vsel %vm336, %v329, %v331
        %v339 = vsel %vm336, %v331, %v333
        %v340 = vsel %vm336, %v333, %v335
        %vm341 = vcmask 64512
        %v343 = vsel %vm341, %v312, 0
        %vm345 = vcmask 1043456
        %v347 = vsel %vm345, %v337, 0
        %v350 = vsel %vm345, %v338, 0
        %v353 = vsel %vm345, %v339, 0
        %v356 = vsel %vm345, %v340, 0
        %358 = vmatpush.bf16.msra.mxu0 0
        %359 = vmatpush.bf16.msra.mxu0 0
        %360 = vmatpush.bf16.msra.mxu0 0
        %361 = vmatpush.bf16.msra.mxu0 0
        %362 = vmatpush.bf16.msra.mxu0 0
        %363 = vmatpush.bf16.msra.mxu0 0
        %364 = vmatpush.bf16.msra.mxu0 0
        %365 = vmatpush.bf16.msra.mxu0 %v347
        %366 = vmatmul.bf16.gmra.mxu0 %v343
        %v367 = vpop.f32.mrf.mxu0
        %v368 = vadd.f32 0.0, %v367
        %v369 = vpop.f32.mrf.mxu0
        %370 = vdwg.mxu0
        %371 = vmatpush.bf16.msra.mxu0 0
        %372 = vmatpush.bf16.msra.mxu0 0
        %373 = vmatpush.bf16.msra.mxu0 0
        %374 = vmatpush.bf16.msra.mxu0 0
        %375 = vmatpush.bf16.msra.mxu0 0
        %376 = vmatpush.bf16.msra.mxu0 0
        %377 = vmatpush.bf16.msra.mxu0 0
        %378 = vmatpush.bf16.msra.mxu0 %v350
        %379 = vmatmul.bf16.gmra.mxu0 %v343
        %v380 = vpop.f32.mrf.mxu0
        %v381 = vadd.f32 0.0, %v380
        %v382 = vpop.f32.mrf.mxu0
        %383 = vdwg.mxu0
        %384 = vmatpush.bf16.msra.mxu0 0
        %385 = vmatpush.bf16.msra.mxu0 0
        %386 = vmatpush.bf16.msra.mxu0 0
        %387 = vmatpush.bf16.msra.mxu0 0
        %388 = vmatpush.bf16.msra.mxu0 0
        %389 = vmatpush.bf16.msra.mxu0 0
        %390 = vmatpush.bf16.msra.mxu0 0
        %391 = vmatpush.bf16.msra.mxu0 %v353
        %392 = vmatmul.bf16.gmra.mxu0 %v343
        %v393 = vpop.f32.mrf.mxu0
        %v394 = vadd.f32 0.0, %v393
        %v395 = vpop.f32.mrf.mxu0
        %396 = vdwg.mxu0
        %397 = vmatpush.bf16.msra.mxu0 0
        %398 = vmatpush.bf16.msra.mxu0 0
        %399 = vmatpush.bf16.msra.mxu0 0
        %400 = vmatpush.bf16.msra.mxu0 0
        %401 = vmatpush.bf16.msra.mxu0 0
        %402 = vmatpush.bf16.msra.mxu0 0
        %403 = vmatpush.bf16.msra.mxu0 0
        %404 = vmatpush.bf16.msra.mxu0 %v356
        %405 = vmatmul.bf16.gmra.mxu0 %v343
        %v406 = vpop.f32.mrf.mxu0
        %v407 = vadd.f32 0.0, %v406
        %v408 = vpop.f32.mrf.mxu0
        %409 = vdwg.mxu0
        %v412 = vunpack.c.l.b16 %v305
        %v413 = vunpack.c.h.b16 %v305
        %v414 = vunpack.c.l.b16 %v306
        %v415 = vunpack.c.h.b16 %v306
        %v416 = vpack.c.b16 %v412, %v412
        %v417 = vpack.c.b16 %v413, %v413
        %v418 = vpack.c.b16 %v414, %v414
        %v419 = vpack.c.b16 %v415, %v415
        %v421 = vsel %vm341, %v307, 0
        %v424 = vsel %vm345, %v416, 0
        %v427 = vsel %vm345, %v417, 0
        %v430 = vsel %vm345, %v418, 0
        %v433 = vsel %vm345, %v419, 0
        %435 = vmatpush.bf16.msra.mxu0 0
        %436 = vmatpush.bf16.msra.mxu0 0
        %437 = vmatpush.bf16.msra.mxu0 0
        %438 = vmatpush.bf16.msra.mxu0 0
        %439 = vmatpush.bf16.msra.mxu0 0
        %440 = vmatpush.bf16.msra.mxu0 0
        %441 = vmatpush.bf16.msra.mxu0 0
        %442 = vmatpush.bf16.msra.mxu0 %v424
        %443 = vmatmul.bf16.gmra.mxu0 %v421
        %v444 = vpop.f32.mrf.mxu0
        %v445 = vadd.f32 %v368, %v444
        %v446 = vpop.f32.mrf.mxu0
        %447 = vdwg.mxu0
        %448 = vmatpush.bf16.msra.mxu0 0
        %449 = vmatpush.bf16.msra.mxu0 0
        %450 = vmatpush.bf16.msra.mxu0 0
        %451 = vmatpush.bf16.msra.mxu0 0
        %452 = vmatpush.bf16.msra.mxu0 0
        %453 = vmatpush.bf16.msra.mxu0 0
        %454 = vmatpush.bf16.msra.mxu0 0
        %455 = vmatpush.bf16.msra.mxu0 %v427
        %456 = vmatmul.bf16.gmra.mxu0 %v421
        %v457 = vpop.f32.mrf.mxu0
        %v458 = vadd.f32 %v381, %v457
        %v459 = vpop.f32.mrf.mxu0
        %460 = vdwg.mxu0
        %461 = vmatpush.bf16.msra.mxu0 0
        %462 = vmatpush.bf16.msra.mxu0 0
        %463 = vmatpush.bf16.msra.mxu0 0
        %464 = vmatpush.bf16.msra.mxu0 0
        %465 = vmatpush.bf16.msra.mxu0 0
        %466 = vmatpush.bf16.msra.mxu0 0
        %467 = vmatpush.bf16.msra.mxu0 0
        %468 = vmatpush.bf16.msra.mxu0 %v430
        %469 = vmatmul.bf16.gmra.mxu0 %v421
        %v470 = vpop.f32.mrf.mxu0
        %v471 = vadd.f32 %v394, %v470
        %v472 = vpop.f32.mrf.mxu0
        %473 = vdwg.mxu0
        %474 = vmatpush.bf16.msra.mxu0 0
        %475 = vmatpush.bf16.msra.mxu0 0
        %476 = vmatpush.bf16.msra.mxu0 0
        %477 = vmatpush.bf16.msra.mxu0 0
        %478 = vmatpush.bf16.msra.mxu0 0
        %479 = vmatpush.bf16.msra.mxu0 0
        %480 = vmatpush.bf16.msra.mxu0 0
        %481 = vmatpush.bf16.msra.mxu0 %v433
        %482 = vmatmul.bf16.gmra.mxu0 %v421
        %v483 = vpop.f32.mrf.mxu0
        %v484 = vadd.f32 %v407, %v483
        %v485 = vpop.f32.mrf.mxu0
        %486 = vdwg.mxu0
        %s487 = scalar_lea.vmem %s1, 8
        %v488 = vld [vmem:[%s487] sm:$0xf]
        %489 = vrot.lane.b32.xlu0 %v321, 126
        %v490 = vpop.permute.xlu0 %489
        %491 = vrot.lane.b32.xlu0 %v322, 126
        %v492 = vpop.permute.xlu0 %491
        %493 = vrot.lane.b32.xlu0 %v323, 126
        %v494 = vpop.permute.xlu0 %493
        %495 = vrot.lane.b32.xlu0 %v324, 126
        %v496 = vpop.permute.xlu0 %495
        %497 = vrot.lane.b32.xlu0 %v325, 126
        %v498 = vpop.permute.xlu0 %497
        %vm499 = vcmask 1031168
        %v500 = vsel %vm499, %v490, %v492
        %v501 = vsel %vm499, %v492, %v494
        %v502 = vsel %vm499, %v494, %v496
        %v503 = vsel %vm499, %v496, %v498
        %v505 = vsel %vm341, %v488, 0
        %v508 = vsel %vm345, %v500, 0
        %v511 = vsel %vm345, %v501, 0
        %v514 = vsel %vm345, %v502, 0
        %v517 = vsel %vm345, %v503, 0
        %519 = vmatpush.bf16.msra.mxu0 0
        %520 = vmatpush.bf16.msra.mxu0 0
        %521 = vmatpush.bf16.msra.mxu0 0
        %522 = vmatpush.bf16.msra.mxu0 0
        %523 = vmatpush.bf16.msra.mxu0 0
        %524 = vmatpush.bf16.msra.mxu0 0
        %525 = vmatpush.bf16.msra.mxu0 0
        %526 = vmatpush.bf16.msra.mxu0 %v508
        %527 = vmatmul.bf16.gmra.mxu0 %v505
        %v528 = vpop.f32.mrf.mxu0
        %v529 = vadd.f32 0.0, %v528
        %v530 = vpop.f32.mrf.mxu0
        %531 = vdwg.mxu0
        %532 = vmatpush.bf16.msra.mxu0 0
        %533 = vmatpush.bf16.msra.mxu0 0
        %534 = vmatpush.bf16.msra.mxu0 0
        %535 = vmatpush.bf16.msra.mxu0 0
        %536 = vmatpush.bf16.msra.mxu0 0
        %537 = vmatpush.bf16.msra.mxu0 0
        %538 = vmatpush.bf16.msra.mxu0 0
        %539 = vmatpush.bf16.msra.mxu0 %v511
        %540 = vmatmul.bf16.gmra.mxu0 %v505
        %v541 = vpop.f32.mrf.mxu0
        %v542 = vadd.f32 0.0, %v541
        %v543 = vpop.f32.mrf.mxu0
        %544 = vdwg.mxu0
        %545 = vmatpush.bf16.msra.mxu0 0
        %546 = vmatpush.bf16.msra.mxu0 0
        %547 = vmatpush.bf16.msra.mxu0 0
        %548 = vmatpush.bf16.msra.mxu0 0
        %549 = vmatpush.bf16.msra.mxu0 0
        %550 = vmatpush.bf16.msra.mxu0 0
        %551 = vmatpush.bf16.msra.mxu0 0
        %552 = vmatpush.bf16.msra.mxu0 %v514
        %553 = vmatmul.bf16.gmra.mxu0 %v505
        %v554 = vpop.f32.mrf.mxu0
        %v555 = vadd.f32 0.0, %v554
        %v556 = vpop.f32.mrf.mxu0
        %557 = vdwg.mxu0
        %558 = vmatpush.bf16.msra.mxu0 0
        %559 = vmatpush.bf16.msra.mxu0 0
        %560 = vmatpush.bf16.msra.mxu0 0
        %561 = vmatpush.bf16.msra.mxu0 0
        %562 = vmatpush.bf16.msra.mxu0 0
        %563 = vmatpush.bf16.msra.mxu0 0
        %564 = vmatpush.bf16.msra.mxu0 0
        %565 = vmatpush.bf16.msra.mxu0 %v517
        %566 = vmatmul.bf16.gmra.mxu0 %v505
        %v567 = vpop.f32.mrf.mxu0
        %v568 = vadd.f32 0.0, %v567
        %v569 = vpop.f32.mrf.mxu0
        %570 = vdwg.mxu0
        %v571 = vadd.f32 %v445, %v529
        %v572 = vadd.f32 %v458, %v542
        %v573 = vadd.f32 %v471, %v555
        %v574 = vadd.f32 %v484, %v568
        %s575 = scalar_lea.vmem %s1, 12
        %v576 = vld [vmem:[%s575] sm:$0xf]
        %577 = vrot.lane.b32.xlu0 %v321, 110
        %v578 = vpop.permute.xlu0 %577
        %579 = vrot.lane.b32.xlu0 %v322, 110
        %v580 = vpop.permute.xlu0 %579
        %581 = vrot.lane.b32.xlu0 %v323, 110
        %v582 = vpop.permute.xlu0 %581
        %583 = vrot.lane.b32.xlu0 %v324, 110
        %v584 = vpop.permute.xlu0 %583
        %585 = vrot.lane.b32.xlu0 %v325, 110
        %v586 = vpop.permute.xlu0 %585
        %vm587 = vcmask 900096
        %v588 = vsel %vm587, %v578, %v580
        %v589 = vsel %vm587, %v580, %v582
        %v590 = vsel %vm587, %v582, %v584
        %v591 = vsel %vm587, %v584, %v586
        %v593 = vsel %vm341, %v576, 0
        %v596 = vsel %vm345, %v588, 0
        %v599 = vsel %vm345, %v589, 0
        %v602 = vsel %vm345, %v590, 0
        %v605 = vsel %vm345, %v591, 0
        %607 = vmatpush.bf16.msra.mxu0 0
        %608 = vmatpush.bf16.msra.mxu0 0
        %609 = vmatpush.bf16.msra.mxu0 0
        %610 = vmatpush.bf16.msra.mxu0 0
        %611 = vmatpush.bf16.msra.mxu0 0
        %612 = vmatpush.bf16.msra.mxu0 0
        %613 = vmatpush.bf16.msra.mxu0 0
        %614 = vmatpush.bf16.msra.mxu0 %v596
        %615 = vmatmul.bf16.gmra.mxu0 %v593
        %v616 = vpop.f32.mrf.mxu0
        %v617 = vadd.f32 0.0, %v616
        %v618 = vpop.f32.mrf.mxu0
        %619 = vdwg.mxu0
        %620 = vmatpush.bf16.msra.mxu0 0
        %621 = vmatpush.bf16.msra.mxu0 0
        %622 = vmatpush.bf16.msra.mxu0 0
        %623 = vmatpush.bf16.msra.mxu0 0
        %624 = vmatpush.bf16.msra.mxu0 0
        %625 = vmatpush.bf16.msra.mxu0 0
        %626 = vmatpush.bf16.msra.mxu0 0
        %627 = vmatpush.bf16.msra.mxu0 %v599
        %628 = vmatmul.bf16.gmra.mxu0 %v593
        %v629 = vpop.f32.mrf.mxu0
        %v630 = vadd.f32 0.0, %v629
        %v631 = vpop.f32.mrf.mxu0
        %632 = vdwg.mxu0
        %633 = vmatpush.bf16.msra.mxu0 0
        %634 = vmatpush.bf16.msra.mxu0 0
        %635 = vmatpush.bf16.msra.mxu0 0
        %636 = vmatpush.bf16.msra.mxu0 0
        %637 = vmatpush.bf16.msra.mxu0 0
        %638 = vmatpush.bf16.msra.mxu0 0
        %639 = vmatpush.bf16.msra.mxu0 0
        %640 = vmatpush.bf16.msra.mxu0 %v602
        %641 = vmatmul.bf16.gmra.mxu0 %v593
        %v642 = vpop.f32.mrf.mxu0
        %v643 = vadd.f32 0.0, %v642
        %v644 = vpop.f32.mrf.mxu0
        %645 = vdwg.mxu0
        %646 = vmatpush.bf16.msra.mxu0 0
        %647 = vmatpush.bf16.msra.mxu0 0
        %648 = vmatpush.bf16.msra.mxu0 0
        %649 = vmatpush.bf16.msra.mxu0 0
        %650 = vmatpush.bf16.msra.mxu0 0
        %651 = vmatpush.bf16.msra.mxu0 0
        %652 = vmatpush.bf16.msra.mxu0 0
        %653 = vmatpush.bf16.msra.mxu0 %v605
        %654 = vmatmul.bf16.gmra.mxu0 %v593
        %v655 = vpop.f32.mrf.mxu0
        %v656 = vadd.f32 0.0, %v655
        %v657 = vpop.f32.mrf.mxu0
        %658 = vdwg.mxu0
        %v659 = vadd.f32 %v571, %v617
        %v660 = vadd.f32 %v572, %v630
        %v661 = vadd.f32 %v573, %v643
        %v662 = vadd.f32 %v574, %v656
        %s663 = scalar_lea.vmem %s1, 16
        %v664 = vld [vmem:[%s663] sm:$0xf]
        %665 = vrot.lane.b32.xlu0 %v321, 109
        %v666 = vpop.permute.xlu0 %665
        %667 = vrot.lane.b32.xlu0 %v322, 109
        %v668 = vpop.permute.xlu0 %667
        %669 = vrot.lane.b32.xlu0 %v323, 109
        %v670 = vpop.permute.xlu0 %669
        %671 = vrot.lane.b32.xlu0 %v324, 109
        %v672 = vpop.permute.xlu0 %671
        %673 = vrot.lane.b32.xlu0 %v325, 109
        %v674 = vpop.permute.xlu0 %673
        %vm675 = vcmask 891904
        %v676 = vsel %vm675, %v666, %v668
        %v677 = vsel %vm675, %v668, %v670
        %v678 = vsel %vm675, %v670, %v672
        %v679 = vsel %vm675, %v672, %v674
        %v681 = vsel %vm341, %v664, 0
        %v684 = vsel %vm345, %v676, 0
        %v687 = vsel %vm345, %v677, 0
        %v690 = vsel %vm345, %v678, 0
        %v693 = vsel %vm345, %v679, 0
        %695 = vmatpush.bf16.msra.mxu0 0
        %696 = vmatpush.bf16.msra.mxu0 0
        %697 = vmatpush.bf16.msra.mxu0 0
        %698 = vmatpush.bf16.msra.mxu0 0
        %699 = vmatpush.bf16.msra.mxu0 0
        %700 = vmatpush.bf16.msra.mxu0 0
        %701 = vmatpush.bf16.msra.mxu0 0
        %702 = vmatpush.bf16.msra.mxu0 %v684
        %703 = vmatmul.bf16.gmra.mxu0 %v681
        %v704 = vpop.f32.mrf.mxu0
        %v705 = vadd.f32 0.0, %v704
        %v706 = vpop.f32.mrf.mxu0
        %707 = vdwg.mxu0
        %708 = vmatpush.bf16.msra.mxu0 0
        %709 = vmatpush.bf16.msra.mxu0 0
        %710 = vmatpush.bf16.msra.mxu0 0
        %711 = vmatpush.bf16.msra.mxu0 0
        %712 = vmatpush.bf16.msra.mxu0 0
        %713 = vmatpush.bf16.msra.mxu0 0
        %714 = vmatpush.bf16.msra.mxu0 0
        %715 = vmatpush.bf16.msra.mxu0 %v687
        %716 = vmatmul.bf16.gmra.mxu0 %v681
        %v717 = vpop.f32.mrf.mxu0
        %v718 = vadd.f32 0.0, %v717
        %v719 = vpop.f32.mrf.mxu0
        %720 = vdwg.mxu0
        %721 = vmatpush.bf16.msra.mxu0 0
        %722 = vmatpush.bf16.msra.mxu0 0
        %723 = vmatpush.bf16.msra.mxu0 0
        %724 = vmatpush.bf16.msra.mxu0 0
        %725 = vmatpush.bf16.msra.mxu0 0
        %726 = vmatpush.bf16.msra.mxu0 0
        %727 = vmatpush.bf16.msra.mxu0 0
        %728 = vmatpush.bf16.msra.mxu0 %v690
        %729 = vmatmul.bf16.gmra.mxu0 %v681
        %v730 = vpop.f32.mrf.mxu0
        %v731 = vadd.f32 0.0, %v730
        %v732 = vpop.f32.mrf.mxu0
        %733 = vdwg.mxu0
        %734 = vmatpush.bf16.msra.mxu0 0
        %735 = vmatpush.bf16.msra.mxu0 0
        %736 = vmatpush.bf16.msra.mxu0 0
        %737 = vmatpush.bf16.msra.mxu0 0
        %738 = vmatpush.bf16.msra.mxu0 0
        %739 = vmatpush.bf16.msra.mxu0 0
        %740 = vmatpush.bf16.msra.mxu0 0
        %741 = vmatpush.bf16.msra.mxu0 %v693
        %742 = vmatmul.bf16.gmra.mxu0 %v681
        %v743 = vpop.f32.mrf.mxu0
        %v744 = vadd.f32 0.0, %v743
        %v745 = vpop.f32.mrf.mxu0
        %746 = vdwg.mxu0
        %v747 = vadd.f32 %v659, %v705
        %v748 = vadd.f32 %v660, %v718
        %v749 = vadd.f32 %v661, %v731
        %v750 = vadd.f32 %v662, %v744
        %s751 = scalar_lea.vmem %s1, 20
        %v752 = vld [vmem:[%s751] sm:$0xf]
        %753 = vrot.lane.b32.xlu0 %v321, 108
        %v754 = vpop.permute.xlu0 %753
        %755 = vrot.lane.b32.xlu0 %v322, 108
        %v756 = vpop.permute.xlu0 %755
        %757 = vrot.lane.b32.xlu0 %v323, 108
        %v758 = vpop.permute.xlu0 %757
        %759 = vrot.lane.b32.xlu0 %v324, 108
        %v760 = vpop.permute.xlu0 %759
        %761 = vrot.lane.b32.xlu0 %v325, 108
        %v762 = vpop.permute.xlu0 %761
        %vm763 = vcmask 883712
        %v764 = vsel %vm763, %v754, %v756
        %v765 = vsel %vm763, %v756, %v758
        %v766 = vsel %vm763, %v758, %v760
        %v767 = vsel %vm763, %v760, %v762
        %v769 = vsel %vm341, %v752, 0
        %v772 = vsel %vm345, %v764, 0
        %v775 = vsel %vm345, %v765, 0
        %v778 = vsel %vm345, %v766, 0
        %v781 = vsel %vm345, %v767, 0
        %783 = vmatpush.bf16.msra.mxu0 0
        %784 = vmatpush.bf16.msra.mxu0 0
        %785 = vmatpush.bf16.msra.mxu0 0
        %786 = vmatpush.bf16.msra.mxu0 0
        %787 = vmatpush.bf16.msra.mxu0 0
        %788 = vmatpush.bf16.msra.mxu0 0
        %789 = vmatpush.bf16.msra.mxu0 0
        %790 = vmatpush.bf16.msra.mxu0 %v772
        %791 = vmatmul.bf16.gmra.mxu0 %v769
        %v792 = vpop.f32.mrf.mxu0
        %v793 = vadd.f32 0.0, %v792
        %v794 = vpop.f32.mrf.mxu0
        %795 = vdwg.mxu0
        %796 = vmatpush.bf16.msra.mxu0 0
        %797 = vmatpush.bf16.msra.mxu0 0
        %798 = vmatpush.bf16.msra.mxu0 0
        %799 = vmatpush.bf16.msra.mxu0 0
        %800 = vmatpush.bf16.msra.mxu0 0
        %801 = vmatpush.bf16.msra.mxu0 0
        %802 = vmatpush.bf16.msra.mxu0 0
        %803 = vmatpush.bf16.msra.mxu0 %v775
        %804 = vmatmul.bf16.gmra.mxu0 %v769
        %v805 = vpop.f32.mrf.mxu0
        %v806 = vadd.f32 0.0, %v805
        %v807 = vpop.f32.mrf.mxu0
        %808 = vdwg.mxu0
        %809 = vmatpush.bf16.msra.mxu0 0
        %810 = vmatpush.bf16.msra.mxu0 0
        %811 = vmatpush.bf16.msra.mxu0 0
        %812 = vmatpush.bf16.msra.mxu0 0
        %813 = vmatpush.bf16.msra.mxu0 0
        %814 = vmatpush.bf16.msra.mxu0 0
        %815 = vmatpush.bf16.msra.mxu0 0
        %816 = vmatpush.bf16.msra.mxu0 %v778
        %817 = vmatmul.bf16.gmra.mxu0 %v769
        %v818 = vpop.f32.mrf.mxu0
        %v819 = vadd.f32 0.0, %v818
        %v820 = vpop.f32.mrf.mxu0
        %821 = vdwg.mxu0
        %822 = vmatpush.bf16.msra.mxu0 0
        %823 = vmatpush.bf16.msra.mxu0 0
        %824 = vmatpush.bf16.msra.mxu0 0
        %825 = vmatpush.bf16.msra.mxu0 0
        %826 = vmatpush.bf16.msra.mxu0 0
        %827 = vmatpush.bf16.msra.mxu0 0
        %828 = vmatpush.bf16.msra.mxu0 0
        %829 = vmatpush.bf16.msra.mxu0 %v781
        %830 = vmatmul.bf16.gmra.mxu0 %v769
        %v831 = vpop.f32.mrf.mxu0
        %v832 = vadd.f32 0.0, %v831
        %v833 = vpop.f32.mrf.mxu0
        %834 = vdwg.mxu0
        %v835 = vadd.f32 %v747, %v793
        %v836 = vadd.f32 %v748, %v806
        %v837 = vadd.f32 %v749, %v819
        %v838 = vadd.f32 %v750, %v832
        %s839 = scalar_lea.vmem %s1, 24
        %v840 = vld [vmem:[%s839] sm:$0xf]
        %841 = vrot.lane.b32.xlu0 %v321, 92
        %v842 = vpop.permute.xlu0 %841
        %843 = vrot.lane.b32.xlu0 %v322, 92
        %v844 = vpop.permute.xlu0 %843
        %845 = vrot.lane.b32.xlu0 %v323, 92
        %v846 = vpop.permute.xlu0 %845
        %847 = vrot.lane.b32.xlu0 %v324, 92
        %v848 = vpop.permute.xlu0 %847
        %849 = vrot.lane.b32.xlu0 %v325, 92
        %v850 = vpop.permute.xlu0 %849
        %vm851 = vcmask 752640
        %v852 = vsel %vm851, %v842, %v844
        %v853 = vsel %vm851, %v844, %v846
        %v854 = vsel %vm851, %v846, %v848
        %v855 = vsel %vm851, %v848, %v850
        %v857 = vsel %vm341, %v840, 0
        %v860 = vsel %vm345, %v852, 0
        %v863 = vsel %vm345, %v853, 0
        %v866 = vsel %vm345, %v854, 0
        %v869 = vsel %vm345, %v855, 0
        %871 = vmatpush.bf16.msra.mxu0 0
        %872 = vmatpush.bf16.msra.mxu0 0
        %873 = vmatpush.bf16.msra.mxu0 0
        %874 = vmatpush.bf16.msra.mxu0 0
        %875 = vmatpush.bf16.msra.mxu0 0
        %876 = vmatpush.bf16.msra.mxu0 0
        %877 = vmatpush.bf16.msra.mxu0 0
        %878 = vmatpush.bf16.msra.mxu0 %v860
        %879 = vmatmul.bf16.gmra.mxu0 %v857
        %v880 = vpop.f32.mrf.mxu0
        %v881 = vadd.f32 0.0, %v880
        %v882 = vpop.f32.mrf.mxu0
        %883 = vdwg.mxu0
        %884 = vmatpush.bf16.msra.mxu0 0
        %885 = vmatpush.bf16.msra.mxu0 0
        %886 = vmatpush.bf16.msra.mxu0 0
        %887 = vmatpush.bf16.msra.mxu0 0
        %888 = vmatpush.bf16.msra.mxu0 0
        %889 = vmatpush.bf16.msra.mxu0 0
        %890 = vmatpush.bf16.msra.mxu0 0
        %891 = vmatpush.bf16.msra.mxu0 %v863
        %892 = vmatmul.bf16.gmra.mxu0 %v857
        %v893 = vpop.f32.mrf.mxu0
        %v894 = vadd.f32 0.0, %v893
        %v895 = vpop.f32.mrf.mxu0
        %896 = vdwg.mxu0
        %897 = vmatpush.bf16.msra.mxu0 0
        %898 = vmatpush.bf16.msra.mxu0 0
        %899 = vmatpush.bf16.msra.mxu0 0
        %900 = vmatpush.bf16.msra.mxu0 0
        %901 = vmatpush.bf16.msra.mxu0 0
        %902 = vmatpush.bf16.msra.mxu0 0
        %903 = vmatpush.bf16.msra.mxu0 0
        %904 = vmatpush.bf16.msra.mxu0 %v866
        %905 = vmatmul.bf16.gmra.mxu0 %v857
        %v906 = vpop.f32.mrf.mxu0
        %v907 = vadd.f32 0.0, %v906
        %v908 = vpop.f32.mrf.mxu0
        %909 = vdwg.mxu0
        %910 = vmatpush.bf16.msra.mxu0 0
        %911 = vmatpush.bf16.msra.mxu0 0
        %912 = vmatpush.bf16.msra.mxu0 0
        %913 = vmatpush.bf16.msra.mxu0 0
        %914 = vmatpush.bf16.msra.mxu0 0
        %915 = vmatpush.bf16.msra.mxu0 0
        %916 = vmatpush.bf16.msra.mxu0 0
        %917 = vmatpush.bf16.msra.mxu0 %v869
        %918 = vmatmul.bf16.gmra.mxu0 %v857
        %v919 = vpop.f32.mrf.mxu0
        %v920 = vadd.f32 0.0, %v919
        %v921 = vpop.f32.mrf.mxu0
        %922 = vdwg.mxu0
        %v923 = vadd.f32 %v835, %v881
        %v924 = vadd.f32 %v836, %v894
        %v925 = vadd.f32 %v837, %v907
        %v926 = vadd.f32 %v838, %v920
        %s927 = scalar_lea.vmem %s1, 28
        %v928 = vld [vmem:[%s927] sm:$0xf]
        %929 = vrot.lane.b32.xlu0 %v321, 91
        %v930 = vpop.permute.xlu0 %929
        %931 = vrot.lane.b32.xlu0 %v322, 91
        %v932 = vpop.permute.xlu0 %931
        %933 = vrot.lane.b32.xlu0 %v323, 91
        %v934 = vpop.permute.xlu0 %933
        %935 = vrot.lane.b32.xlu0 %v324, 91
        %v936 = vpop.permute.xlu0 %935
        %937 = vrot.lane.b32.xlu0 %v325, 91
        %v938 = vpop.permute.xlu0 %937
        %vm939 = vcmask 744448
        %v940 = vsel %vm939, %v930, %v932
        %v941 = vsel %vm939, %v932, %v934
        %v942 = vsel %vm939, %v934, %v936
        %v943 = vsel %vm939, %v936, %v938
        %v945 = vsel %vm341, %v928, 0
        %v948 = vsel %vm345, %v940, 0
        %v951 = vsel %vm345, %v941, 0
        %v954 = vsel %vm345, %v942, 0
        %v957 = vsel %vm345, %v943, 0
        %959 = vmatpush.bf16.msra.mxu0 0
        %960 = vmatpush.bf16.msra.mxu0 0
        %961 = vmatpush.bf16.msra.mxu0 0
        %962 = vmatpush.bf16.msra.mxu0 0
        %963 = vmatpush.bf16.msra.mxu0 0
        %964 = vmatpush.bf16.msra.mxu0 0
        %965 = vmatpush.bf16.msra.mxu0 0
        %966 = vmatpush.bf16.msra.mxu0 %v948
        %967 = vmatmul.bf16.gmra.mxu0 %v945
        %v968 = vpop.f32.mrf.mxu0
        %v969 = vadd.f32 0.0, %v968
        %v970 = vpop.f32.mrf.mxu0
        %971 = vdwg.mxu0
        %972 = vmatpush.bf16.msra.mxu0 0
        %973 = vmatpush.bf16.msra.mxu0 0
        %974 = vmatpush.bf16.msra.mxu0 0
        %975 = vmatpush.bf16.msra.mxu0 0
        %976 = vmatpush.bf16.msra.mxu0 0
        %977 = vmatpush.bf16.msra.mxu0 0
        %978 = vmatpush.bf16.msra.mxu0 0
        %979 = vmatpush.bf16.msra.mxu0 %v951
        %980 = vmatmul.bf16.gmra.mxu0 %v945
        %v981 = vpop.f32.mrf.mxu0
        %v982 = vadd.f32 0.0, %v981
        %v983 = vpop.f32.mrf.mxu0
        %984 = vdwg.mxu0
        %985 = vmatpush.bf16.msra.mxu0 0
        %986 = vmatpush.bf16.msra.mxu0 0
        %987 = vmatpush.bf16.msra.mxu0 0
        %988 = vmatpush.bf16.msra.mxu0 0
        %989 = vmatpush.bf16.msra.mxu0 0
        %990 = vmatpush.bf16.msra.mxu0 0
        %991 = vmatpush.bf16.msra.mxu0 0
        %992 = vmatpush.bf16.msra.mxu0 %v954
        %993 = vmatmul.bf16.gmra.mxu0 %v945
        %v994 = vpop.f32.mrf.mxu0
        %v995 = vadd.f32 0.0, %v994
        %v996 = vpop.f32.mrf.mxu0
        %997 = vdwg.mxu0
        %998 = vmatpush.bf16.msra.mxu0 0
        %999 = vmatpush.bf16.msra.mxu0 0
        %1000 = vmatpush.bf16.msra.mxu0 0
        %1001 = vmatpush.bf16.msra.mxu0 0
        %1002 = vmatpush.bf16.msra.mxu0 0
        %1003 = vmatpush.bf16.msra.mxu0 0
        %1004 = vmatpush.bf16.msra.mxu0 0
        %1005 = vmatpush.bf16.msra.mxu0 %v957
        %1006 = vmatmul.bf16.gmra.mxu0 %v945
        %v1007 = vpop.f32.mrf.mxu0
        %v1008 = vadd.f32 0.0, %v1007
        %v1009 = vpop.f32.mrf.mxu0
        %1010 = vdwg.mxu0
        %v1011 = vadd.f32 %v923, %v969
        %v1012 = vadd.f32 %v924, %v982
        %v1013 = vadd.f32 %v925, %v995
        %v1014 = vadd.f32 %v926, %v1008
        %s1015 = scalar_lea.vmem %s1, 32
        %v1016 = vld [vmem:[%s1015] sm:$0xf]
        %1017 = vrot.lane.b32.xlu0 %v321, 90
        %v1018 = vpop.permute.xlu0 %1017
        %1019 = vrot.lane.b32.xlu0 %v322, 90
        %v1020 = vpop.permute.xlu0 %1019
        %1021 = vrot.lane.b32.xlu0 %v323, 90
        %v1022 = vpop.permute.xlu0 %1021
        %1023 = vrot.lane.b32.xlu0 %v324, 90
        %v1024 = vpop.permute.xlu0 %1023
        %1025 = vrot.lane.b32.xlu0 %v325, 90
        %v1026 = vpop.permute.xlu0 %1025
        %vm1027 = vcmask 736256
        %v1028 = vsel %vm1027, %v1018, %v1020
        %v1029 = vsel %vm1027, %v1020, %v1022
        %v1030 = vsel %vm1027, %v1022, %v1024
        %v1031 = vsel %vm1027, %v1024, %v1026
        %v1033 = vsel %vm341, %v1016, 0
        %v1036 = vsel %vm345, %v1028, 0
        %v1039 = vsel %vm345, %v1029, 0
        %v1042 = vsel %vm345, %v1030, 0
        %v1045 = vsel %vm345, %v1031, 0
        %1047 = vmatpush.bf16.msra.mxu0 0
        %1048 = vmatpush.bf16.msra.mxu0 0
        %1049 = vmatpush.bf16.msra.mxu0 0
        %1050 = vmatpush.bf16.msra.mxu0 0
        %1051 = vmatpush.bf16.msra.mxu0 0
        %1052 = vmatpush.bf16.msra.mxu0 0
        %1053 = vmatpush.bf16.msra.mxu0 0
        %1054 = vmatpush.bf16.msra.mxu0 %v1036
        %1055 = vmatmul.bf16.gmra.mxu0 %v1033
        %v1056 = vpop.f32.mrf.mxu0
        %v1057 = vadd.f32 0.0, %v1056
        %v1058 = vpop.f32.mrf.mxu0
        %1059 = vdwg.mxu0
        %1060 = vmatpush.bf16.msra.mxu0 0
        %1061 = vmatpush.bf16.msra.mxu0 0
        %1062 = vmatpush.bf16.msra.mxu0 0
        %1063 = vmatpush.bf16.msra.mxu0 0
        %1064 = vmatpush.bf16.msra.mxu0 0
        %1065 = vmatpush.bf16.msra.mxu0 0
        %1066 = vmatpush.bf16.msra.mxu0 0
        %1067 = vmatpush.bf16.msra.mxu0 %v1039
        %1068 = vmatmul.bf16.gmra.mxu0 %v1033
        %v1069 = vpop.f32.mrf.mxu0
        %v1070 = vadd.f32 0.0, %v1069
        %v1071 = vpop.f32.mrf.mxu0
        %1072 = vdwg.mxu0
        %1073 = vmatpush.bf16.msra.mxu0 0
        %1074 = vmatpush.bf16.msra.mxu0 0
        %1075 = vmatpush.bf16.msra.mxu0 0
        %1076 = vmatpush.bf16.msra.mxu0 0
        %1077 = vmatpush.bf16.msra.mxu0 0
        %1078 = vmatpush.bf16.msra.mxu0 0
        %1079 = vmatpush.bf16.msra.mxu0 0
        %1080 = vmatpush.bf16.msra.mxu0 %v1042
        %1081 = vmatmul.bf16.gmra.mxu0 %v1033
        %v1082 = vpop.f32.mrf.mxu0
        %v1083 = vadd.f32 0.0, %v1082
        %v1084 = vpop.f32.mrf.mxu0
        %1085 = vdwg.mxu0
        %1086 = vmatpush.bf16.msra.mxu0 0
        %1087 = vmatpush.bf16.msra.mxu0 0
        %1088 = vmatpush.bf16.msra.mxu0 0
        %1089 = vmatpush.bf16.msra.mxu0 0
        %1090 = vmatpush.bf16.msra.mxu0 0
        %1091 = vmatpush.bf16.msra.mxu0 0
        %1092 = vmatpush.bf16.msra.mxu0 0
        %1093 = vmatpush.bf16.msra.mxu0 %v1045
        %1094 = vmatmul.bf16.gmra.mxu0 %v1033
        %v1095 = vpop.f32.mrf.mxu0
        %v1096 = vadd.f32 0.0, %v1095
        %v1097 = vpop.f32.mrf.mxu0
        %1098 = vdwg.mxu0
        %v1099 = vadd.f32 %v1011, %v1057
        %v1100 = vadd.f32 %v1012, %v1070
        %v1101 = vadd.f32 %v1013, %v1083
        %v1102 = vadd.f32 %v1014, %v1096
        %v1103 = vld [vmem:[%s3] sm:$0xff]
        %1105 = vset.pattern.permute.xlu0 0
        %1106 = vperm.xlu0 %1105, %v1103
        %v1107 = vpop.permute.xlu0 %1106
        %v1109 = vmul.f32 %v1099, %v1107
        %v1110 = vmul.f32 %v1100, %v1107
        %v1111 = vmul.f32 %v1101, %v1107
        %v1112 = vmul.f32 %v1102, %v1107
        %v1113 = vld [vmem:[%s4] sm:$0xff]
        %1115 = vset.pattern.permute.xlu0 0
        %1116 = vperm.xlu0 %1115, %v1113
        %v1117 = vpop.permute.xlu0 %1116
        %v1119 = vadd.f32 %v1109, %v1117
        %v1120 = vadd.f32 %v1110, %v1117
        %v1121 = vadd.f32 %v1111, %v1117
        %v1122 = vadd.f32 %v1112, %v1117
        %v1123 = vmax.f32 %v1119, 0.0
        %v1124 = vmax.f32 %v1120, 0.0
        %v1125 = vmax.f32 %v1121, 0.0
        %v1126 = vmax.f32 %v1122, 0.0
        %v1127 = vld [vmem:[%s7] sm:$0xf]
        %v1129 = vperm.slane %v1127, 0
        %v1130 = vperm.slane %v1127, 1
        %v1131 = vperm.slane %v1127, 2
        %v1132 = vperm.slane %v1127, 3
        %v1137 = vmul.f32 %v1123, %v1129
        %v1138 = vmul.f32 %v1124, %v1130
        %v1139 = vmul.f32 %v1125, %v1131
        %v1140 = vmul.f32 %v1126, %v1132
        %v1141 = vpack.c.bf16 %v1138, %v1137
        %v1142 = vpack.c.bf16 %v1140, %v1139
        %1143 = vst [vmem:[#allocation2] sm:$0xff] %v1141
        %1144 = vst [vmem:[#allocation2 + $0x8] sm:$0xff] %v1142
        %v1145 = vld [vmem:[#allocation2] sm:$0xff]
        %v1146 = vld [vmem:[#allocation2 + $0x8] sm:$0xf]
        %v1147 = vld [vmem:[%s2] sm:$0xf]
        %v1148 = vld [vmem:[#allocation2] sm:$0xff]
        %v1149 = vld [vmem:[#allocation2 + $0x8] sm:$0xff]
        %s1150 = scalar_lea.vmem %s2, 4
        %v1151 = vld [vmem:[%s1150] sm:$0xf]
        %v1154 = vunpack.c.l.b16 %v1148
        %v1155 = vunpack.c.h.b16 %v1148
        %v1156 = vunpack.c.l.b16 %v1149
        %v1157 = vunpack.c.h.b16 %v1149
        %v1158 = vpack.c.b16 %v1154, %v1154
        %v1159 = vpack.c.b16 %v1155, %v1155
        %v1160 = vpack.c.b16 %v1156, %v1156
        %v1161 = vpack.c.b16 %v1157, %v1157
        %1162 = vrot.lane.b32.xlu0 %v1158, 127
        %v1163 = vpop.permute.xlu0 %1162
        %1164 = vrot.lane.b32.xlu0 %v1159, 127
        %v1165 = vpop.permute.xlu0 %1164
        %1166 = vrot.lane.b32.xlu0 %v1160, 127
        %v1167 = vpop.permute.xlu0 %1166
        %1168 = vrot.lane.b32.xlu0 %v1161, 127
        %v1169 = vpop.permute.xlu0 %1168
        %v1170 = vsel %vm336, %v1163, %v1165
        %v1171 = vsel %vm336, %v1165, %v1167
        %v1172 = vsel %vm336, %v1167, %v1169
        %v1174 = vsel %vm341, %v1151, 0
        %v1177 = vsel %vm345, %v1170, 0
        %v1180 = vsel %vm345, %v1171, 0
        %v1183 = vsel %vm345, %v1172, 0
        %1185 = vmatpush.bf16.msra.mxu0 0
        %1186 = vmatpush.bf16.msra.mxu0 0
        %1187 = vmatpush.bf16.msra.mxu0 0
        %1188 = vmatpush.bf16.msra.mxu0 0
        %1189 = vmatpush.bf16.msra.mxu0 0
        %1190 = vmatpush.bf16.msra.mxu0 0
        %1191 = vmatpush.bf16.msra.mxu0 0
        %1192 = vmatpush.bf16.msra.mxu0 %v1177
        %1193 = vmatmul.bf16.gmra.mxu0 %v1174
        %v1194 = vpop.f32.mrf.mxu0
        %v1195 = vadd.f32 0.0, %v1194
        %v1196 = vpop.f32.mrf.mxu0
        %1197 = vdwg.mxu0
        %1198 = vmatpush.bf16.msra.mxu0 0
        %1199 = vmatpush.bf16.msra.mxu0 0
        %1200 = vmatpush.bf16.msra.mxu0 0
        %1201 = vmatpush.bf16.msra.mxu0 0
        %1202 = vmatpush.bf16.msra.mxu0 0
        %1203 = vmatpush.bf16.msra.mxu0 0
        %1204 = vmatpush.bf16.msra.mxu0 0
        %1205 = vmatpush.bf16.msra.mxu0 %v1180
        %1206 = vmatmul.bf16.gmra.mxu0 %v1174
        %v1207 = vpop.f32.mrf.mxu0
        %v1208 = vadd.f32 0.0, %v1207
        %v1209 = vpop.f32.mrf.mxu0
        %1210 = vdwg.mxu0
        %1211 = vmatpush.bf16.msra.mxu0 0
        %1212 = vmatpush.bf16.msra.mxu0 0
        %1213 = vmatpush.bf16.msra.mxu0 0
        %1214 = vmatpush.bf16.msra.mxu0 0
        %1215 = vmatpush.bf16.msra.mxu0 0
        %1216 = vmatpush.bf16.msra.mxu0 0
        %1217 = vmatpush.bf16.msra.mxu0 0
        %1218 = vmatpush.bf16.msra.mxu0 %v1183
        %1219 = vmatmul.bf16.gmra.mxu0 %v1174
        %v1220 = vpop.f32.mrf.mxu0
        %v1221 = vadd.f32 0.0, %v1220
        %v1222 = vpop.f32.mrf.mxu0
        %1223 = vdwg.mxu0
        %v1226 = vunpack.c.l.b16 %v1145
        %v1227 = vunpack.c.h.b16 %v1145
        %v1228 = vunpack.c.l.b16 %v1146
        %v1229 = vpack.c.b16 %v1226, %v1226
        %v1230 = vpack.c.b16 %v1227, %v1227
        %v1231 = vpack.c.b16 %v1228, %v1228
        %v1233 = vsel %vm341, %v1147, 0
        %v1236 = vsel %vm345, %v1229, 0
        %v1239 = vsel %vm345, %v1230, 0
        %v1242 = vsel %vm345, %v1231, 0
        %1244 = vmatpush.bf16.msra.mxu0 0
        %1245 = vmatpush.bf16.msra.mxu0 0
        %1246 = vmatpush.bf16.msra.mxu0 0
        %1247 = vmatpush.bf16.msra.mxu0 0
        %1248 = vmatpush.bf16.msra.mxu0 0
        %1249 = vmatpush.bf16.msra.mxu0 0
        %1250 = vmatpush.bf16.msra.mxu0 0
        %1251 = vmatpush.bf16.msra.mxu0 %v1236
        %1252 = vmatmul.bf16.gmra.mxu0 %v1233
        %v1253 = vpop.f32.mrf.mxu0
        %v1254 = vadd.f32 %v1195, %v1253
        %v1255 = vpop.f32.mrf.mxu0
        %1256 = vdwg.mxu0
        %1257 = vmatpush.bf16.msra.mxu0 0
        %1258 = vmatpush.bf16.msra.mxu0 0
        %1259 = vmatpush.bf16.msra.mxu0 0
        %1260 = vmatpush.bf16.msra.mxu0 0
        %1261 = vmatpush.bf16.msra.mxu0 0
        %1262 = vmatpush.bf16.msra.mxu0 0
        %1263 = vmatpush.bf16.msra.mxu0 0
        %1264 = vmatpush.bf16.msra.mxu0 %v1239
        %1265 = vmatmul.bf16.gmra.mxu0 %v1233
        %v1266 = vpop.f32.mrf.mxu0
        %v1267 = vadd.f32 %v1208, %v1266
        %v1268 = vpop.f32.mrf.mxu0
        %1269 = vdwg.mxu0
        %1270 = vmatpush.bf16.msra.mxu0 0
        %1271 = vmatpush.bf16.msra.mxu0 0
        %1272 = vmatpush.bf16.msra.mxu0 0
        %1273 = vmatpush.bf16.msra.mxu0 0
        %1274 = vmatpush.bf16.msra.mxu0 0
        %1275 = vmatpush.bf16.msra.mxu0 0
        %1276 = vmatpush.bf16.msra.mxu0 0
        %1277 = vmatpush.bf16.msra.mxu0 %v1242
        %1278 = vmatmul.bf16.gmra.mxu0 %v1233
        %v1279 = vpop.f32.mrf.mxu0
        %v1280 = vadd.f32 %v1221, %v1279
        %v1281 = vpop.f32.mrf.mxu0
        %1282 = vdwg.mxu0
        %s1283 = scalar_lea.vmem %s2, 8
        %v1284 = vld [vmem:[%s1283] sm:$0xf]
        %1285 = vrot.lane.b32.xlu0 %v1158, 126
        %v1286 = vpop.permute.xlu0 %1285
        %1287 = vrot.lane.b32.xlu0 %v1159, 126
        %v1288 = vpop.permute.xlu0 %1287
        %1289 = vrot.lane.b32.xlu0 %v1160, 126
        %v1290 = vpop.permute.xlu0 %1289
        %1291 = vrot.lane.b32.xlu0 %v1161, 126
        %v1292 = vpop.permute.xlu0 %1291
        %v1293 = vsel %vm499, %v1286, %v1288
        %v1294 = vsel %vm499, %v1288, %v1290
        %v1295 = vsel %vm499, %v1290, %v1292
        %v1297 = vsel %vm341, %v1284, 0
        %v1300 = vsel %vm345, %v1293, 0
        %v1303 = vsel %vm345, %v1294, 0
        %v1306 = vsel %vm345, %v1295, 0
        %1308 = vmatpush.bf16.msra.mxu0 0
        %1309 = vmatpush.bf16.msra.mxu0 0
        %1310 = vmatpush.bf16.msra.mxu0 0
        %1311 = vmatpush.bf16.msra.mxu0 0
        %1312 = vmatpush.bf16.msra.mxu0 0
        %1313 = vmatpush.bf16.msra.mxu0 0
        %1314 = vmatpush.bf16.msra.mxu0 0
        %1315 = vmatpush.bf16.msra.mxu0 %v1300
        %1316 = vmatmul.bf16.gmra.mxu0 %v1297
        %v1317 = vpop.f32.mrf.mxu0
        %v1318 = vadd.f32 0.0, %v1317
        %v1319 = vpop.f32.mrf.mxu0
        %1320 = vdwg.mxu0
        %1321 = vmatpush.bf16.msra.mxu0 0
        %1322 = vmatpush.bf16.msra.mxu0 0
        %1323 = vmatpush.bf16.msra.mxu0 0
        %1324 = vmatpush.bf16.msra.mxu0 0
        %1325 = vmatpush.bf16.msra.mxu0 0
        %1326 = vmatpush.bf16.msra.mxu0 0
        %1327 = vmatpush.bf16.msra.mxu0 0
        %1328 = vmatpush.bf16.msra.mxu0 %v1303
        %1329 = vmatmul.bf16.gmra.mxu0 %v1297
        %v1330 = vpop.f32.mrf.mxu0
        %v1331 = vadd.f32 0.0, %v1330
        %v1332 = vpop.f32.mrf.mxu0
        %1333 = vdwg.mxu0
        %1334 = vmatpush.bf16.msra.mxu0 0
        %1335 = vmatpush.bf16.msra.mxu0 0
        %1336 = vmatpush.bf16.msra.mxu0 0
        %1337 = vmatpush.bf16.msra.mxu0 0
        %1338 = vmatpush.bf16.msra.mxu0 0
        %1339 = vmatpush.bf16.msra.mxu0 0
        %1340 = vmatpush.bf16.msra.mxu0 0
        %1341 = vmatpush.bf16.msra.mxu0 %v1306
        %1342 = vmatmul.bf16.gmra.mxu0 %v1297
        %v1343 = vpop.f32.mrf.mxu0
        %v1344 = vadd.f32 0.0, %v1343
        %v1345 = vpop.f32.mrf.mxu0
        %1346 = vdwg.mxu0
        %v1347 = vadd.f32 %v1254, %v1318
        %v1348 = vadd.f32 %v1267, %v1331
        %v1349 = vadd.f32 %v1280, %v1344
        %s1350 = scalar_lea.vmem %s2, 12
        %v1351 = vld [vmem:[%s1350] sm:$0xf]
        %1352 = vrot.lane.b32.xlu0 %v1158, 110
        %v1353 = vpop.permute.xlu0 %1352
        %1354 = vrot.lane.b32.xlu0 %v1159, 110
        %v1355 = vpop.permute.xlu0 %1354
        %1356 = vrot.lane.b32.xlu0 %v1160, 110
        %v1357 = vpop.permute.xlu0 %1356
        %1358 = vrot.lane.b32.xlu0 %v1161, 110
        %v1359 = vpop.permute.xlu0 %1358
        %v1360 = vsel %vm587, %v1353, %v1355
        %v1361 = vsel %vm587, %v1355, %v1357
        %v1362 = vsel %vm587, %v1357, %v1359
        %v1364 = vsel %vm341, %v1351, 0
        %v1367 = vsel %vm345, %v1360, 0
        %v1370 = vsel %vm345, %v1361, 0
        %v1373 = vsel %vm345, %v1362, 0
        %1375 = vmatpush.bf16.msra.mxu0 0
        %1376 = vmatpush.bf16.msra.mxu0 0
        %1377 = vmatpush.bf16.msra.mxu0 0
        %1378 = vmatpush.bf16.msra.mxu0 0
        %1379 = vmatpush.bf16.msra.mxu0 0
        %1380 = vmatpush.bf16.msra.mxu0 0
        %1381 = vmatpush.bf16.msra.mxu0 0
        %1382 = vmatpush.bf16.msra.mxu0 %v1367
        %1383 = vmatmul.bf16.gmra.mxu0 %v1364
        %v1384 = vpop.f32.mrf.mxu0
        %v1385 = vadd.f32 0.0, %v1384
        %v1386 = vpop.f32.mrf.mxu0
        %1387 = vdwg.mxu0
        %1388 = vmatpush.bf16.msra.mxu0 0
        %1389 = vmatpush.bf16.msra.mxu0 0
        %1390 = vmatpush.bf16.msra.mxu0 0
        %1391 = vmatpush.bf16.msra.mxu0 0
        %1392 = vmatpush.bf16.msra.mxu0 0
        %1393 = vmatpush.bf16.msra.mxu0 0
        %1394 = vmatpush.bf16.msra.mxu0 0
        %1395 = vmatpush.bf16.msra.mxu0 %v1370
        %1396 = vmatmul.bf16.gmra.mxu0 %v1364
        %v1397 = vpop.f32.mrf.mxu0
        %v1398 = vadd.f32 0.0, %v1397
        %v1399 = vpop.f32.mrf.mxu0
        %1400 = vdwg.mxu0
        %1401 = vmatpush.bf16.msra.mxu0 0
        %1402 = vmatpush.bf16.msra.mxu0 0
        %1403 = vmatpush.bf16.msra.mxu0 0
        %1404 = vmatpush.bf16.msra.mxu0 0
        %1405 = vmatpush.bf16.msra.mxu0 0
        %1406 = vmatpush.bf16.msra.mxu0 0
        %1407 = vmatpush.bf16.msra.mxu0 0
        %1408 = vmatpush.bf16.msra.mxu0 %v1373
        %1409 = vmatmul.bf16.gmra.mxu0 %v1364
        %v1410 = vpop.f32.mrf.mxu0
        %v1411 = vadd.f32 0.0, %v1410
        %v1412 = vpop.f32.mrf.mxu0
        %1413 = vdwg.mxu0
        %v1414 = vadd.f32 %v1347, %v1385
        %v1415 = vadd.f32 %v1348, %v1398
        %v1416 = vadd.f32 %v1349, %v1411
        %s1417 = scalar_lea.vmem %s2, 16
        %v1418 = vld [vmem:[%s1417] sm:$0xf]
        %1419 = vrot.lane.b32.xlu0 %v1158, 109
        %v1420 = vpop.permute.xlu0 %1419
        %1421 = vrot.lane.b32.xlu0 %v1159, 109
        %v1422 = vpop.permute.xlu0 %1421
        %1423 = vrot.lane.b32.xlu0 %v1160, 109
        %v1424 = vpop.permute.xlu0 %1423
        %1425 = vrot.lane.b32.xlu0 %v1161, 109
        %v1426 = vpop.permute.xlu0 %1425
        %v1427 = vsel %vm675, %v1420, %v1422
        %v1428 = vsel %vm675, %v1422, %v1424
        %v1429 = vsel %vm675, %v1424, %v1426
        %v1431 = vsel %vm341, %v1418, 0
        %v1434 = vsel %vm345, %v1427, 0
        %v1437 = vsel %vm345, %v1428, 0
        %v1440 = vsel %vm345, %v1429, 0
        %1442 = vmatpush.bf16.msra.mxu0 0
        %1443 = vmatpush.bf16.msra.mxu0 0
        %1444 = vmatpush.bf16.msra.mxu0 0
        %1445 = vmatpush.bf16.msra.mxu0 0
        %1446 = vmatpush.bf16.msra.mxu0 0
        %1447 = vmatpush.bf16.msra.mxu0 0
        %1448 = vmatpush.bf16.msra.mxu0 0
        %1449 = vmatpush.bf16.msra.mxu0 %v1434
        %1450 = vmatmul.bf16.gmra.mxu0 %v1431
        %v1451 = vpop.f32.mrf.mxu0
        %v1452 = vadd.f32 0.0, %v1451
        %v1453 = vpop.f32.mrf.mxu0
        %1454 = vdwg.mxu0
        %1455 = vmatpush.bf16.msra.mxu0 0
        %1456 = vmatpush.bf16.msra.mxu0 0
        %1457 = vmatpush.bf16.msra.mxu0 0
        %1458 = vmatpush.bf16.msra.mxu0 0
        %1459 = vmatpush.bf16.msra.mxu0 0
        %1460 = vmatpush.bf16.msra.mxu0 0
        %1461 = vmatpush.bf16.msra.mxu0 0
        %1462 = vmatpush.bf16.msra.mxu0 %v1437
        %1463 = vmatmul.bf16.gmra.mxu0 %v1431
        %v1464 = vpop.f32.mrf.mxu0
        %v1465 = vadd.f32 0.0, %v1464
        %v1466 = vpop.f32.mrf.mxu0
        %1467 = vdwg.mxu0
        %1468 = vmatpush.bf16.msra.mxu0 0
        %1469 = vmatpush.bf16.msra.mxu0 0
        %1470 = vmatpush.bf16.msra.mxu0 0
        %1471 = vmatpush.bf16.msra.mxu0 0
        %1472 = vmatpush.bf16.msra.mxu0 0
        %1473 = vmatpush.bf16.msra.mxu0 0
        %1474 = vmatpush.bf16.msra.mxu0 0
        %1475 = vmatpush.bf16.msra.mxu0 %v1440
        %1476 = vmatmul.bf16.gmra.mxu0 %v1431
        %v1477 = vpop.f32.mrf.mxu0
        %v1478 = vadd.f32 0.0, %v1477
        %v1479 = vpop.f32.mrf.mxu0
        %1480 = vdwg.mxu0
        %v1481 = vadd.f32 %v1414, %v1452
        %v1482 = vadd.f32 %v1415, %v1465
        %v1483 = vadd.f32 %v1416, %v1478
        %s1484 = scalar_lea.vmem %s2, 20
        %v1485 = vld [vmem:[%s1484] sm:$0xf]
        %1486 = vrot.lane.b32.xlu0 %v1158, 108
        %v1487 = vpop.permute.xlu0 %1486
        %1488 = vrot.lane.b32.xlu0 %v1159, 108
        %v1489 = vpop.permute.xlu0 %1488
        %1490 = vrot.lane.b32.xlu0 %v1160, 108
        %v1491 = vpop.permute.xlu0 %1490
        %1492 = vrot.lane.b32.xlu0 %v1161, 108
        %v1493 = vpop.permute.xlu0 %1492
        %v1494 = vsel %vm763, %v1487, %v1489
        %v1495 = vsel %vm763, %v1489, %v1491
        %v1496 = vsel %vm763, %v1491, %v1493
        %v1498 = vsel %vm341, %v1485, 0
        %v1501 = vsel %vm345, %v1494, 0
        %v1504 = vsel %vm345, %v1495, 0
        %v1507 = vsel %vm345, %v1496, 0
        %1509 = vmatpush.bf16.msra.mxu0 0
        %1510 = vmatpush.bf16.msra.mxu0 0
        %1511 = vmatpush.bf16.msra.mxu0 0
        %1512 = vmatpush.bf16.msra.mxu0 0
        %1513 = vmatpush.bf16.msra.mxu0 0
        %1514 = vmatpush.bf16.msra.mxu0 0
        %1515 = vmatpush.bf16.msra.mxu0 0
        %1516 = vmatpush.bf16.msra.mxu0 %v1501
        %1517 = vmatmul.bf16.gmra.mxu0 %v1498
        %v1518 = vpop.f32.mrf.mxu0
        %v1519 = vadd.f32 0.0, %v1518
        %v1520 = vpop.f32.mrf.mxu0
        %1521 = vdwg.mxu0
        %1522 = vmatpush.bf16.msra.mxu0 0
        %1523 = vmatpush.bf16.msra.mxu0 0
        %1524 = vmatpush.bf16.msra.mxu0 0
        %1525 = vmatpush.bf16.msra.mxu0 0
        %1526 = vmatpush.bf16.msra.mxu0 0
        %1527 = vmatpush.bf16.msra.mxu0 0
        %1528 = vmatpush.bf16.msra.mxu0 0
        %1529 = vmatpush.bf16.msra.mxu0 %v1504
        %1530 = vmatmul.bf16.gmra.mxu0 %v1498
        %v1531 = vpop.f32.mrf.mxu0
        %v1532 = vadd.f32 0.0, %v1531
        %v1533 = vpop.f32.mrf.mxu0
        %1534 = vdwg.mxu0
        %1535 = vmatpush.bf16.msra.mxu0 0
        %1536 = vmatpush.bf16.msra.mxu0 0
        %1537 = vmatpush.bf16.msra.mxu0 0
        %1538 = vmatpush.bf16.msra.mxu0 0
        %1539 = vmatpush.bf16.msra.mxu0 0
        %1540 = vmatpush.bf16.msra.mxu0 0
        %1541 = vmatpush.bf16.msra.mxu0 0
        %1542 = vmatpush.bf16.msra.mxu0 %v1507
        %1543 = vmatmul.bf16.gmra.mxu0 %v1498
        %v1544 = vpop.f32.mrf.mxu0
        %v1545 = vadd.f32 0.0, %v1544
        %v1546 = vpop.f32.mrf.mxu0
        %1547 = vdwg.mxu0
        %v1548 = vadd.f32 %v1481, %v1519
        %v1549 = vadd.f32 %v1482, %v1532
        %v1550 = vadd.f32 %v1483, %v1545
        %s1551 = scalar_lea.vmem %s2, 24
        %v1552 = vld [vmem:[%s1551] sm:$0xf]
        %1553 = vrot.lane.b32.xlu0 %v1158, 92
        %v1554 = vpop.permute.xlu0 %1553
        %1555 = vrot.lane.b32.xlu0 %v1159, 92
        %v1556 = vpop.permute.xlu0 %1555
        %1557 = vrot.lane.b32.xlu0 %v1160, 92
        %v1558 = vpop.permute.xlu0 %1557
        %1559 = vrot.lane.b32.xlu0 %v1161, 92
        %v1560 = vpop.permute.xlu0 %1559
        %v1561 = vsel %vm851, %v1554, %v1556
        %v1562 = vsel %vm851, %v1556, %v1558
        %v1563 = vsel %vm851, %v1558, %v1560
        %v1565 = vsel %vm341, %v1552, 0
        %v1568 = vsel %vm345, %v1561, 0
        %v1571 = vsel %vm345, %v1562, 0
        %v1574 = vsel %vm345, %v1563, 0
        %1576 = vmatpush.bf16.msra.mxu0 0
        %1577 = vmatpush.bf16.msra.mxu0 0
        %1578 = vmatpush.bf16.msra.mxu0 0
        %1579 = vmatpush.bf16.msra.mxu0 0
        %1580 = vmatpush.bf16.msra.mxu0 0
        %1581 = vmatpush.bf16.msra.mxu0 0
        %1582 = vmatpush.bf16.msra.mxu0 0
        %1583 = vmatpush.bf16.msra.mxu0 %v1568
        %1584 = vmatmul.bf16.gmra.mxu0 %v1565
        %v1585 = vpop.f32.mrf.mxu0
        %v1586 = vadd.f32 0.0, %v1585
        %v1587 = vpop.f32.mrf.mxu0
        %1588 = vdwg.mxu0
        %1589 = vmatpush.bf16.msra.mxu0 0
        %1590 = vmatpush.bf16.msra.mxu0 0
        %1591 = vmatpush.bf16.msra.mxu0 0
        %1592 = vmatpush.bf16.msra.mxu0 0
        %1593 = vmatpush.bf16.msra.mxu0 0
        %1594 = vmatpush.bf16.msra.mxu0 0
        %1595 = vmatpush.bf16.msra.mxu0 0
        %1596 = vmatpush.bf16.msra.mxu0 %v1571
        %1597 = vmatmul.bf16.gmra.mxu0 %v1565
        %v1598 = vpop.f32.mrf.mxu0
        %v1599 = vadd.f32 0.0, %v1598
        %v1600 = vpop.f32.mrf.mxu0
        %1601 = vdwg.mxu0
        %1602 = vmatpush.bf16.msra.mxu0 0
        %1603 = vmatpush.bf16.msra.mxu0 0
        %1604 = vmatpush.bf16.msra.mxu0 0
        %1605 = vmatpush.bf16.msra.mxu0 0
        %1606 = vmatpush.bf16.msra.mxu0 0
        %1607 = vmatpush.bf16.msra.mxu0 0
        %1608 = vmatpush.bf16.msra.mxu0 0
        %1609 = vmatpush.bf16.msra.mxu0 %v1574
        %1610 = vmatmul.bf16.gmra.mxu0 %v1565
        %v1611 = vpop.f32.mrf.mxu0
        %v1612 = vadd.f32 0.0, %v1611
        %v1613 = vpop.f32.mrf.mxu0
        %1614 = vdwg.mxu0
        %v1615 = vadd.f32 %v1548, %v1586
        %v1616 = vadd.f32 %v1549, %v1599
        %v1617 = vadd.f32 %v1550, %v1612
        %s1618 = scalar_lea.vmem %s2, 28
        %v1619 = vld [vmem:[%s1618] sm:$0xf]
        %1620 = vrot.lane.b32.xlu0 %v1158, 91
        %v1621 = vpop.permute.xlu0 %1620
        %1622 = vrot.lane.b32.xlu0 %v1159, 91
        %v1623 = vpop.permute.xlu0 %1622
        %1624 = vrot.lane.b32.xlu0 %v1160, 91
        %v1625 = vpop.permute.xlu0 %1624
        %1626 = vrot.lane.b32.xlu0 %v1161, 91
        %v1627 = vpop.permute.xlu0 %1626
        %v1628 = vsel %vm939, %v1621, %v1623
        %v1629 = vsel %vm939, %v1623, %v1625
        %v1630 = vsel %vm939, %v1625, %v1627
        %v1632 = vsel %vm341, %v1619, 0
        %v1635 = vsel %vm345, %v1628, 0
        %v1638 = vsel %vm345, %v1629, 0
        %v1641 = vsel %vm345, %v1630, 0
        %1643 = vmatpush.bf16.msra.mxu0 0
        %1644 = vmatpush.bf16.msra.mxu0 0
        %1645 = vmatpush.bf16.msra.mxu0 0
        %1646 = vmatpush.bf16.msra.mxu0 0
        %1647 = vmatpush.bf16.msra.mxu0 0
        %1648 = vmatpush.bf16.msra.mxu0 0
        %1649 = vmatpush.bf16.msra.mxu0 0
        %1650 = vmatpush.bf16.msra.mxu0 %v1635
        %1651 = vmatmul.bf16.gmra.mxu0 %v1632
        %v1652 = vpop.f32.mrf.mxu0
        %v1653 = vadd.f32 0.0, %v1652
        %v1654 = vpop.f32.mrf.mxu0
        %1655 = vdwg.mxu0
        %1656 = vmatpush.bf16.msra.mxu0 0
        %1657 = vmatpush.bf16.msra.mxu0 0
        %1658 = vmatpush.bf16.msra.mxu0 0
        %1659 = vmatpush.bf16.msra.mxu0 0
        %1660 = vmatpush.bf16.msra.mxu0 0
        %1661 = vmatpush.bf16.msra.mxu0 0
        %1662 = vmatpush.bf16.msra.mxu0 0
        %1663 = vmatpush.bf16.msra.mxu0 %v1638
        %1664 = vmatmul.bf16.gmra.mxu0 %v1632
        %v1665 = vpop.f32.mrf.mxu0
        %v1666 = vadd.f32 0.0, %v1665
        %v1667 = vpop.f32.mrf.mxu0
        %1668 = vdwg.mxu0
        %1669 = vmatpush.bf16.msra.mxu0 0
        %1670 = vmatpush.bf16.msra.mxu0 0
        %1671 = vmatpush.bf16.msra.mxu0 0
        %1672 = vmatpush.bf16.msra.mxu0 0
        %1673 = vmatpush.bf16.msra.mxu0 0
        %1674 = vmatpush.bf16.msra.mxu0 0
        %1675 = vmatpush.bf16.msra.mxu0 0
        %1676 = vmatpush.bf16.msra.mxu0 %v1641
        %1677 = vmatmul.bf16.gmra.mxu0 %v1632
        %v1678 = vpop.f32.mrf.mxu0
        %v1679 = vadd.f32 0.0, %v1678
        %v1680 = vpop.f32.mrf.mxu0
        %1681 = vdwg.mxu0
        %v1682 = vadd.f32 %v1615, %v1653
        %v1683 = vadd.f32 %v1616, %v1666
        %v1684 = vadd.f32 %v1617, %v1679
        %s1685 = scalar_lea.vmem %s2, 32
        %v1686 = vld [vmem:[%s1685] sm:$0xf]
        %1687 = vrot.lane.b32.xlu0 %v1158, 90
        %v1688 = vpop.permute.xlu0 %1687
        %1689 = vrot.lane.b32.xlu0 %v1159, 90
        %v1690 = vpop.permute.xlu0 %1689
        %1691 = vrot.lane.b32.xlu0 %v1160, 90
        %v1692 = vpop.permute.xlu0 %1691
        %1693 = vrot.lane.b32.xlu0 %v1161, 90
        %v1694 = vpop.permute.xlu0 %1693
        %v1695 = vsel %vm1027, %v1688, %v1690
        %v1696 = vsel %vm1027, %v1690, %v1692
        %v1697 = vsel %vm1027, %v1692, %v1694
        %v1699 = vsel %vm341, %v1686, 0
        %v1702 = vsel %vm345, %v1695, 0
        %v1705 = vsel %vm345, %v1696, 0
        %v1708 = vsel %vm345, %v1697, 0
        %1710 = vmatpush.bf16.msra.mxu0 0
        %1711 = vmatpush.bf16.msra.mxu0 0
        %1712 = vmatpush.bf16.msra.mxu0 0
        %1713 = vmatpush.bf16.msra.mxu0 0
        %1714 = vmatpush.bf16.msra.mxu0 0
        %1715 = vmatpush.bf16.msra.mxu0 0
        %1716 = vmatpush.bf16.msra.mxu0 0
        %1717 = vmatpush.bf16.msra.mxu0 %v1702
        %1718 = vmatmul.bf16.gmra.mxu0 %v1699
        %v1719 = vpop.f32.mrf.mxu0
        %v1720 = vadd.f32 0.0, %v1719
        %v1721 = vpop.f32.mrf.mxu0
        %1722 = vdwg.mxu0
        %1723 = vmatpush.bf16.msra.mxu0 0
        %1724 = vmatpush.bf16.msra.mxu0 0
        %1725 = vmatpush.bf16.msra.mxu0 0
        %1726 = vmatpush.bf16.msra.mxu0 0
        %1727 = vmatpush.bf16.msra.mxu0 0
        %1728 = vmatpush.bf16.msra.mxu0 0
        %1729 = vmatpush.bf16.msra.mxu0 0
        %1730 = vmatpush.bf16.msra.mxu0 %v1705
        %1731 = vmatmul.bf16.gmra.mxu0 %v1699
        %v1732 = vpop.f32.mrf.mxu0
        %v1733 = vadd.f32 0.0, %v1732
        %v1734 = vpop.f32.mrf.mxu0
        %1735 = vdwg.mxu0
        %1736 = vmatpush.bf16.msra.mxu0 0
        %1737 = vmatpush.bf16.msra.mxu0 0
        %1738 = vmatpush.bf16.msra.mxu0 0
        %1739 = vmatpush.bf16.msra.mxu0 0
        %1740 = vmatpush.bf16.msra.mxu0 0
        %1741 = vmatpush.bf16.msra.mxu0 0
        %1742 = vmatpush.bf16.msra.mxu0 0
        %1743 = vmatpush.bf16.msra.mxu0 %v1708
        %1744 = vmatmul.bf16.gmra.mxu0 %v1699
        %v1745 = vpop.f32.mrf.mxu0
        %v1746 = vadd.f32 0.0, %v1745
        %v1747 = vpop.f32.mrf.mxu0
        %1748 = vdwg.mxu0
        %v1749 = vadd.f32 %v1682, %v1720
        %v1750 = vadd.f32 %v1683, %v1733
        %v1751 = vadd.f32 %v1684, %v1746
        %v1752 = vld [vmem:[%s5] sm:$0xff]
        %1754 = vset.pattern.permute.xlu0 0
        %1755 = vperm.xlu0 %1754, %v1752
        %v1756 = vpop.permute.xlu0 %1755
        %v1758 = vmul.f32 %v1749, %v1756
        %v1759 = vmul.f32 %v1750, %v1756
        %v1760 = vmul.f32 %v1751, %v1756
        %v1761 = vld [vmem:[%s6] sm:$0xff]
        %1763 = vset.pattern.permute.xlu0 0
        %1764 = vperm.xlu0 %1763, %v1761
        %v1765 = vpop.permute.xlu0 %1764
        %v1767 = vadd.f32 %v1758, %v1765
        %v1768 = vadd.f32 %v1759, %v1765
        %v1769 = vadd.f32 %v1760, %v1765
        %v1770 = vld [vmem:[%s303] sm:$0xff]
        %v1771 = vld [vmem:[%s303 + $0x8] sm:$0xff]
        %v1772 = vunpack.c.l.bf16 %v1770
        %v1773 = vunpack.c.h.bf16 %v1770
        %v1774 = vunpack.c.l.bf16 %v1771
        %v1775 = vunpack.c.h.bf16 %v1771
        %1780 = vrot.lane.b32.xlu0 %v1772, 90
        %v1781 = vpop.permute.xlu0 %1780
        %1782 = vrot.lane.b32.xlu0 %v1773, 90
        %v1783 = vpop.permute.xlu0 %1782
        %1784 = vrot.lane.b32.xlu0 %v1774, 90
        %v1785 = vpop.permute.xlu0 %1784
        %1786 = vrot.lane.b32.xlu0 %v1775, 90
        %v1787 = vpop.permute.xlu0 %1786
        %vm1788 = vcmask 736256
        %v1789 = vsel %vm1788, %v1781, %v1783
        %v1790 = vsel %vm1788, %v1783, %v1785
        %v1791 = vsel %vm1788, %v1785, %v1787
        %v1795 = vadd.f32 %v1767, %v1789
        %v1796 = vadd.f32 %v1768, %v1790
        %v1797 = vadd.f32 %v1769, %v1791
        %v1798 = vmax.f32 %v1795, 0.0
        %v1799 = vmax.f32 %v1796, 0.0
        %v1800 = vmax.f32 %v1797, 0.0
        %v1801 = vpack.c.bf16 %v1799, %v1798
        %v1802 = vpack.c.bf16 %v1800, %v1800
        %1803 = vst [vmem:[%s298] sm:$0xff] %v1801
        %1804 = vst [vmem:[%s298 + $0x8] sm:$0xf] %v1802
        %s1805 = sand.u32 %s203, 1
        %s1806 = scalar_lea.sflag [#allocation4], %s1805
        %s1807 = sand.u32 %s203, 1
        %s1808 = smul.addr %s1807, 12
        %s1809 = scalar_lea.vmem [#allocation3], %s1808
        // Predicated region
        $region53: #{tpu_custom_call.1} parent=51 // pred_check
          %p1810 = pneg %p213
        $region54: #{tpu_custom_call.1} parent=51 // pred_check_branch
          %1812 = sbr.rel (%p1810) target = $region56
        $region55: #{tpu_custom_call.1} parent=51 // pred_region
          %1814 = vsyncadd %s1806, 0
          %s1815 = smul.addr %s22, 3
          %s1816 = smul.addr %s1815, 4
          %s1817 = scalar_lea.hbm %s8, %s1816
          %s1819 = sshll.u32 %s1809, 4
          %s1820 = int_to_ptr.vmem [resolvable:$true] %s1819
          %s1821 = sshll.u32 %s1817, 4
          %s1822 = int_to_ptr.hbm [resolvable:$true] %s1821
          %1824 = dma.vmem_to_hbm [thread:$0]  %s1820, 192, %s1822, %s1806
        $region56: #{tpu_custom_call.1} parent=51 // pred_fallthru
          _
      $region52: #{tpu_custom_call.1} parent=5 // pred_fallthru
        _
      %p1825 = scmp.le.s32.totalorder 2, %s17
      // Predicated region
      $region57: #{tpu_custom_call.1} parent=5 // pred_check
        %p1826 = pneg %p1825
      $region58: #{tpu_custom_call.1} parent=5 // pred_check_branch
        %1828 = sbr.rel (%p1826) target = $region60
      $region59: #{tpu_custom_call.1} parent=5 // pred_region
        %s1829 = ssub.s32 %s17, 2
        // Predicated region
        $region61: #{tpu_custom_call.1} parent=59 // pred_check
          %p1830 = pneg %p219
        $region62: #{tpu_custom_call.1} parent=59 // pred_check_branch
          %1832 = sbr.rel (%p1830) target = $region64
        $region63: #{tpu_custom_call.1} parent=59 // pred_region
          %s1833 = sand.u32 %s204, 1
          %s1834 = scalar_lea.sflag [#allocation4], %s1833
          %s1835 = sand.u32 %s204, 1
          %s1836 = smul.addr %s1835, 12
          %s1837 = scalar_lea.vmem [#allocation3], %s1836
          %1839 = dma.done %s1834, 192
        $region64: #{tpu_custom_call.1} parent=59 // pred_fallthru
          _
      $region60: #{tpu_custom_call.1} parent=5 // pred_fallthru
        _
    $region6: #{tpu_custom_call.1} parent=1 // loop_footer
      %s21 = sadd.s32 1, %s17
    $region7: #{tpu_custom_call.1} parent=1 // loop_footer_branch
      %16 = sbr.rel target = $region3
    $region8: #{tpu_custom_call.1} parent=1 // loop_exit
      _
    %1840 = vsyncpa [#allocation4], 1
    %s1841 = scalar_lea.sflag [#allocation4], 1
    %1842 = vsyncpa %s1841, 1

</llo_original>
